<compile_context>
chip_gen: v7x
topology: tpu7x:2x2x1
jax: 0.10.0
libtpu: 0.0.40
codegen_flags: <defaults>
</compile_context>

<pallas_src>
import math
from functools import partial

import jax
import jax.numpy as jnp
from jax import lax
from jax.experimental import pallas as pl
from jax.experimental.pallas import tpu as pltpu

N_EMBD = 128
N_HEAD = 4
HEAD_SIZE = N_EMBD // N_HEAD     # 32
FFN_HIDDEN = 4 * N_EMBD          # 512
BLOCK_SIZE = 256                 # tril buffer size; only tril[:T,:T] is used
LN_EPS = 1e-5
MASK_VALUE = -1e30               # large finite negative; exp() underflows to 0


def _layernorm_time_axis(x, gamma, beta, eps):
    """Faithful to the module: normalize over dim=1 (T), unbiased variance."""
    t = x.shape[1]
    mean = jnp.mean(x, axis=1, keepdims=True)
    d = x - mean
    var = jnp.sum(d * d, axis=1, keepdims=True) * (1.0 / (t - 1))
    inv = lax.rsqrt(var + eps)
    return gamma * (d * inv) + beta


def block_kernel(x_ref, g1_ref, be1_ref, wqkv_ref, bqkv_ref, wp_ref, bp_ref,
                 g2_ref, be2_ref, w1_ref, bf1_ref, w2_ref, bf2_ref, o_ref,
                 *, n_head):
    Bb, T, C = x_ref.shape
    hs = C // n_head

    x = x_ref[...].astype(jnp.float32)                        # (Bb, T, C)

    # ---- ln1 (over the T axis, as the module does) --------------------------
    ln1 = _layernorm_time_axis(x, g1_ref[...], be1_ref[...], LN_EPS)

    # ---- fused K|Q|V projection for all heads: one (Bb*T, C)@(C, 3C) matmul --
    ln1_2d = ln1.reshape(Bb * T, C).astype(jnp.bfloat16)
    qkv = jnp.dot(ln1_2d, wqkv_ref[...],
                  preferred_element_type=jnp.float32) + bqkv_ref[...]
    k = qkv[:, 0 * C:1 * C].reshape(Bb, T, C).astype(jnp.bfloat16)
    # fold the C**-0.5 scale into q (module uses C = n_embd, not head_size);
    # single f32 multiply + single bf16 cast for all heads.
    q = (qkv[:, 1 * C:2 * C] * (C ** -0.5)).reshape(Bb, T, C).astype(jnp.bfloat16)
    v = qkv[:, 2 * C:3 * C].reshape(Bb, T, C).astype(jnp.bfloat16)

    # causal mask (tril[:T,:T] == 0 -> masked out)
    row = lax.broadcasted_iota(jnp.int32, (T, T), 0)
    col = lax.broadcasted_iota(jnp.int32, (T, T), 1)
    causal = (row >= col)[None]                               # (1, T, T)

    # ---- per-head attention + fused output projection -----------------------
    # sa = concat_h(o_h) @ w_proj + b_proj == sum_h o_h @ w_proj[h*hs:(h+1)*hs]
    # -> accumulate per-head, no lane-offset concatenate.
    sa = jnp.broadcast_to(bp_ref[...].astype(jnp.float32), (Bb * T, C))
    for h in range(n_head):
        sl = slice(h * hs, (h + 1) * hs)
        qh = q[:, :, sl]                                      # (Bb, T, hs) bf16
        kh = k[:, :, sl]
        vh = v[:, :, sl]
        s = jnp.einsum("btd,bsd->bts", qh, kh,
                       preferred_element_type=jnp.float32)    # (Bb, T, T)
        s = jnp.where(causal, s, MASK_VALUE)
        s = s - jnp.max(s, axis=-1, keepdims=True)
        p = jnp.exp(s)
        p = p * pl.reciprocal(jnp.sum(p, axis=-1, keepdims=True), approx=True)
        oh = jnp.einsum("bts,bsd->btd", p.astype(jnp.bfloat16), vh,
                        preferred_element_type=jnp.float32)   # (Bb, T, hs)
        sa = sa + jnp.dot(oh.reshape(Bb * T, hs).astype(jnp.bfloat16),
                          wp_ref[sl, :],
                          preferred_element_type=jnp.float32)

    # ---- residual ------------------------------------------------------------
    h1 = x + sa.reshape(Bb, T, C)

    # ---- ln2 + feed-forward + residual --------------------------------------
    ln2 = _layernorm_time_axis(h1, g2_ref[...], be2_ref[...], LN_EPS)
    hdn = jnp.dot(ln2.reshape(Bb * T, C).astype(jnp.bfloat16), w1_ref[...],
                  preferred_element_type=jnp.float32) + bf1_ref[...]
    hdn = jnp.maximum(hdn, 0.0)
    ffn = jnp.dot(hdn.astype(jnp.bfloat16), w2_ref[...],
                  preferred_element_type=jnp.float32) + bf2_ref[...]
    out = h1 + ffn.reshape(Bb, T, C)

    o_ref[...] = out.astype(o_ref.dtype)                      # 128-lane-dense write


def block_forward(x, g1, be1, w_qkv, b_qkv, w_proj, b_proj, g2, be2,
                  w_ff1, b_ff1, w_ff2, b_ff2, *, n_head=N_HEAD, block_b=None):
    B, T, C = x.shape
    assert w_qkv.shape == (C, 3 * C)

    if block_b is None:
        # amortize per-step overhead (aim for a few hundred rows per step)
        block_b = max(1, min(B, 256 // max(T, 1)))
        # ... but keep >=2 "parallel" grid steps when B allows (dual-TC chips)
        if B >= 2:
            block_b = min(block_b, max(1, B // 2))
        while B % block_b:
            block_b -= 1
    grid = (B // block_b,)

    def whole(shape):
        zeros = (0,) * len(shape)
        return pl.BlockSpec(shape, lambda b, _z=zeros: _z)

    return pl.pallas_call(
        partial(block_kernel, n_head=n_head),
        out_shape=jax.ShapeDtypeStruct((B, T, C), x.dtype),
        grid_spec=pltpu.PrefetchScalarGridSpec(
            num_scalar_prefetch=0,
            grid=grid,
            in_specs=[
                pl.BlockSpec((block_b, T, C), lambda b: (b, 0, 0)),  # x
                whole(g1.shape), whole(be1.shape),                   # ln1
                whole(w_qkv.shape), whole(b_qkv.shape),              # fused K|Q|V
                whole(w_proj.shape), whole(b_proj.shape),            # attn proj
                whole(g2.shape), whole(be2.shape),                   # ln2
                whole(w_ff1.shape), whole(b_ff1.shape),              # ffn layer 1
                whole(w_ff2.shape), whole(b_ff2.shape),              # ffn layer 2
            ],
            out_specs=pl.BlockSpec((block_b, T, C), lambda b: (b, 0, 0)),
        ),
        compiler_params=pltpu.CompilerParams(
            dimension_semantics=("parallel",)),
    )(x, g1, be1, w_qkv, b_qkv, w_proj, b_proj, g2, be2,
      w_ff1, b_ff1, w_ff2, b_ff2)


def reference_block(x, wk, bk, wq, bq, wv, bv, w_proj, b_proj,
                    g1, be1, g2, be2, w_ff1, b_ff1, w_ff2, b_ff2):
    """Pure-JAX f32 reference, faithful to the PyTorch module."""
    B, T, C = x.shape

    def ln(y, g, b):
        m = y.mean(axis=1, keepdims=True)
        v = y.var(axis=1, keepdims=True, ddof=1)           # torch.var (unbiased)
        return g * (y - m) / jnp.sqrt(v + LN_EPS) + b

    def one_head(y, w_k, b_k, w_q, b_q, w_v, b_v):
        kk = y @ w_k + b_k
        qq = y @ w_q + b_q
        vv = y @ w_v + b_v
        wei = jnp.einsum("btd,bsd->bts", qq, kk) * (C ** -0.5)
        mask = jnp.tril(jnp.ones((T, T), dtype=bool))
        wei = jnp.where(mask[None], wei, -jnp.inf)
        wei = jax.nn.softmax(wei, axis=-1)
        return jnp.einsum("bts,bsd->btd", wei, vv)

    y1 = ln(x, g1, be1)
    heads = [one_head(y1, wk[h], bk[h], wq[h], bq[h], wv[h], bv[h])
             for h in range(len(wk))]
    sa = jnp.concatenate(heads, axis=-1) @ w_proj + b_proj
    h1 = x + sa
    y2 = ln(h1, g2, be2)
    ffn = jnp.maximum(y2 @ w_ff1 + b_ff1, 0.0) @ w_ff2 + b_ff2
    return h1 + ffn


if __name__ == "__main__":
    B, T, C, H = 2, 8, N_EMBD, HEAD_SIZE

    key = jax.random.PRNGKey(0)
    keys = list(jax.random.split(key, 32))
    it = iter(keys)

    def linear(kw, kb, fan_in, fan_out):
        bound = 1.0 / math.sqrt(fan_in)
        w = jax.random.uniform(kw, (fan_in, fan_out), jnp.float32, -bound, bound)
        b = jax.random.uniform(kb, (1, fan_out), jnp.float32, -bound, bound)
        return w, b

    x = jax.random.normal(next(it), (B, T, C), dtype=jnp.float32)

    wk, bk, wq, bq, wv, bv = [], [], [], [], [], []
    for _ in range(N_HEAD):
        w, b = linear(next(it), next(it), C, H); wk.append(w); bk.append(b)
        w, b = linear(next(it), next(it), C, H); wq.append(w); bq.append(b)
        w, b = linear(next(it), next(it), C, H); wv.append(w); bv.append(b)
    w_proj, b_proj = linear(next(it), next(it), C, C)
    w_ff1, b_ff1 = linear(next(it), next(it), C, FFN_HIDDEN)
    w_ff2, b_ff2 = linear(next(it), next(it), FFN_HIDDEN, C)

    g1 = jnp.ones((1, C), jnp.float32); be1 = jnp.zeros((1, C), jnp.float32)
    g2 = jnp.ones((1, C), jnp.float32); be2 = jnp.zeros((1, C), jnp.float32)

    # Fuse all heads' K|Q|V projections into one (C, 3C) weight / (1, 3C) bias.
    w_qkv = jnp.concatenate([jnp.concatenate(wk, axis=1),
                             jnp.concatenate(wq, axis=1),
                             jnp.concatenate(wv, axis=1)], axis=1)
    b_qkv = jnp.concatenate([jnp.concatenate(bk, axis=1),
                             jnp.concatenate(bq, axis=1),
                             jnp.concatenate(bv, axis=1)], axis=1)

    out = block_forward(
        x, g1, be1,
        w_qkv.astype(jnp.bfloat16), b_qkv,
        w_proj.astype(jnp.bfloat16), b_proj,
        g2, be2,
        w_ff1.astype(jnp.bfloat16), b_ff1,
        w_ff2.astype(jnp.bfloat16), b_ff2)
    out = jax.block_until_ready(out)

    ref = reference_block(x, wk, bk, wq, bq, wv, bv, w_proj, b_proj,
                          g1, be1, g2, be2, w_ff1, b_ff1, w_ff2, b_ff2)

    assert out.shape == (B, T, C)
    # bf16 MXU inputs (f32 accumulation) -> loosened tolerance vs f32 reference
    max_err = float(jnp.max(jnp.abs(out - ref)))
    assert jnp.allclose(out, ref, atol=3e-2, rtol=3e-2), f"max_err={max_err}"

    print("KERNEL_OK")
</pallas_src>

<mosaic_0001>
module attributes {stable_mosaic.version = 11 : i64} {
  func.func @block_kernel(%arg0: i32, %arg1: memref<1x8x128xf32, #tpu.memory_space<vmem>>, %arg2: memref<1x128xf32, #tpu.memory_space<vmem>>, %arg3: memref<1x128xf32, #tpu.memory_space<vmem>>, %arg4: memref<128x384xbf16, #tpu.memory_space<vmem>>, %arg5: memref<1x384xf32, #tpu.memory_space<vmem>>, %arg6: memref<128x128xbf16, #tpu.memory_space<vmem>>, %arg7: memref<1x128xf32, #tpu.memory_space<vmem>>, %arg8: memref<1x128xf32, #tpu.memory_space<vmem>>, %arg9: memref<1x128xf32, #tpu.memory_space<vmem>>, %arg10: memref<128x512xbf16, #tpu.memory_space<vmem>>, %arg11: memref<1x512xf32, #tpu.memory_space<vmem>>, %arg12: memref<512x128xbf16, #tpu.memory_space<vmem>>, %arg13: memref<1x128xf32, #tpu.memory_space<vmem>>, %arg14: memref<1x8x128xf32, #tpu.memory_space<vmem>>) attributes {dimension_semantics = [#tpu.dimension_semantics<parallel>], iteration_bounds = array<i64: 2>, scalar_prefetch = 0 : i64, scratch_operands = 0 : i64, tpu.core_type = #tpu.core_type<tc>, window_params = [{transform_indices = @transform_0, window_bounds = array<i64: 1, 8, 128>}, {pipeline_mode = #tpu.pipeline_mode<synchronous>, transform_indices = @transform_1, window_bounds = array<i64: 1, 128>}, {pipeline_mode = #tpu.pipeline_mode<synchronous>, transform_indices = @transform_2, window_bounds = array<i64: 1, 128>}, {pipeline_mode = #tpu.pipeline_mode<synchronous>, transform_indices = @transform_3, window_bounds = array<i64: 128, 384>}, {pipeline_mode = #tpu.pipeline_mode<synchronous>, transform_indices = @transform_4, window_bounds = array<i64: 1, 384>}, {pipeline_mode = #tpu.pipeline_mode<synchronous>, transform_indices = @transform_5, window_bounds = array<i64: 128, 128>}, {pipeline_mode = #tpu.pipeline_mode<synchronous>, transform_indices = @transform_6, window_bounds = array<i64: 1, 128>}, {pipeline_mode = #tpu.pipeline_mode<synchronous>, transform_indices = @transform_7, window_bounds = array<i64: 1, 128>}, {pipeline_mode = #tpu.pipeline_mode<synchronous>, transform_indices = @transform_8, window_bounds = array<i64: 1, 128>}, {pipeline_mode = #tpu.pipeline_mode<synchronous>, transform_indices = @transform_9, window_bounds = array<i64: 128, 512>}, {pipeline_mode = #tpu.pipeline_mode<synchronous>, transform_indices = @transform_10, window_bounds = array<i64: 1, 512>}, {pipeline_mode = #tpu.pipeline_mode<synchronous>, transform_indices = @transform_11, window_bounds = array<i64: 512, 128>}, {pipeline_mode = #tpu.pipeline_mode<synchronous>, transform_indices = @transform_12, window_bounds = array<i64: 1, 128>}, {transform_indices = @transform_13, window_bounds = array<i64: 1, 8, 128>}]} {
    %c0 = arith.constant 0 : index
    %c0_0 = arith.constant 0 : index
    %c0_1 = arith.constant 0 : index
    %0 = vector.load %arg1[%c0, %c0_0, %c0_1] : memref<1x8x128xf32, #tpu.memory_space<vmem>>, vector<1x8x128xf32>
    %c0_2 = arith.constant 0 : index
    %c0_3 = arith.constant 0 : index
    %1 = vector.load %arg2[%c0_2, %c0_3] : memref<1x128xf32, #tpu.memory_space<vmem>>, vector<1x128xf32>
    %c0_4 = arith.constant 0 : index
    %c0_5 = arith.constant 0 : index
    %2 = vector.load %arg3[%c0_4, %c0_5] : memref<1x128xf32, #tpu.memory_space<vmem>>, vector<1x128xf32>
    %cst = arith.constant dense<0.000000e+00> : vector<1x128xf32>
    %3 = vector.multi_reduction <add>, %0, %cst [1] : vector<1x8x128xf32> to vector<1x128xf32>
    %4 = vector.shape_cast %3 : vector<1x128xf32> to vector<1x1x128xf32>
    %cst_6 = arith.constant 8.000000e+00 : f32
    %5 = vector.broadcast %cst_6 : f32 to vector<1x1x128xf32>
    %6 = arith.divf %4, %5 : vector<1x1x128xf32>
    %7 = vector.broadcast %6 : vector<1x1x128xf32> to vector<1x8x128xf32>
    %8 = arith.subf %0, %7 : vector<1x8x128xf32>
    %9 = arith.mulf %8, %8 : vector<1x8x128xf32>
    %cst_7 = arith.constant dense<0.000000e+00> : vector<1x128xf32>
    %10 = vector.multi_reduction <add>, %9, %cst_7 [1] : vector<1x8x128xf32> to vector<1x128xf32>
    %11 = vector.shape_cast %10 : vector<1x128xf32> to vector<1x1x128xf32>
    %cst_8 = arith.constant 0.142857149 : f32
    %12 = vector.broadcast %cst_8 : f32 to vector<1x1x128xf32>
    %13 = arith.mulf %11, %12 : vector<1x1x128xf32>
    %cst_9 = arith.constant 9.99999974E-6 : f32
    %14 = vector.broadcast %cst_9 : f32 to vector<1x1x128xf32>
    %15 = arith.addf %13, %14 : vector<1x1x128xf32>
    %16 = math.rsqrt %15 : vector<1x1x128xf32>
    %17 = vector.broadcast %16 : vector<1x1x128xf32> to vector<1x8x128xf32>
    %18 = arith.mulf %8, %17 : vector<1x8x128xf32>
    %19 = vector.shape_cast %1 : vector<1x128xf32> to vector<1x1x128xf32>
    %20 = vector.broadcast %19 : vector<1x1x128xf32> to vector<1x8x128xf32>
    %21 = arith.mulf %20, %18 : vector<1x8x128xf32>
    %22 = vector.shape_cast %2 : vector<1x128xf32> to vector<1x1x128xf32>
    %23 = vector.broadcast %22 : vector<1x1x128xf32> to vector<1x8x128xf32>
    %24 = arith.addf %21, %23 : vector<1x8x128xf32>
    %25 = vector.shape_cast %24 : vector<1x8x128xf32> to vector<8x128xf32>
    %26 = arith.truncf %25 : vector<8x128xf32> to vector<8x128xbf16>
    %c0_10 = arith.constant 0 : index
    %c0_11 = arith.constant 0 : index
    %27 = vector.load %arg4[%c0_10, %c0_11] : memref<128x384xbf16, #tpu.memory_space<vmem>>, vector<128x384xbf16>
    %cst_12 = arith.constant dense<0.000000e+00> : vector<8x384xf32>
    %28 = tpu.matmul %26, %27, %cst_12 {dimension_numbers = #tpu.dot_dimension_numbers<[1], [0], [0], [1], [0, 0, 1, 1], [], []>} : vector<8x128xbf16>, vector<128x384xbf16>, vector<8x384xf32> -> vector<8x384xf32>
    %c0_13 = arith.constant 0 : index
    %c0_14 = arith.constant 0 : index
    %29 = vector.load %arg5[%c0_13, %c0_14] : memref<1x384xf32, #tpu.memory_space<vmem>>, vector<1x384xf32>
    %30 = vector.broadcast %29 : vector<1x384xf32> to vector<8x384xf32>
    %31 = arith.addf %28, %30 : vector<8x384xf32>
    %32 = vector.extract_strided_slice %31 {offsets = [0, 0], sizes = [8, 128], strides = [1, 1]} : vector<8x384xf32> to vector<8x128xf32>
    %33 = vector.shape_cast %32 : vector<8x128xf32> to vector<1x8x128xf32>
    %34 = arith.truncf %33 : vector<1x8x128xf32> to vector<1x8x128xbf16>
    %35 = vector.extract_strided_slice %31 {offsets = [0, 128], sizes = [8, 128], strides = [1, 1]} : vector<8x384xf32> to vector<8x128xf32>
    %cst_15 = arith.constant 0.0883883461 : f32
    %36 = vector.broadcast %cst_15 : f32 to vector<8x128xf32>
    %37 = arith.mulf %35, %36 : vector<8x128xf32>
    %38 = vector.shape_cast %37 : vector<8x128xf32> to vector<1x8x128xf32>
    %39 = arith.truncf %38 : vector<1x8x128xf32> to vector<1x8x128xbf16>
    %40 = vector.extract_strided_slice %31 {offsets = [0, 256], sizes = [8, 128], strides = [1, 1]} : vector<8x384xf32> to vector<8x128xf32>
    %41 = vector.shape_cast %40 : vector<8x128xf32> to vector<1x8x128xf32>
    %42 = arith.truncf %41 : vector<1x8x128xf32> to vector<1x8x128xbf16>
    %43 = tpu.iota {dimensions = array<i32: 0>} : vector<8x8xi32>
    %44 = tpu.iota {dimensions = array<i32: 1>} : vector<8x8xi32>
    %45 = arith.cmpi sge, %43, %44 : vector<8x8xi32>
    %46 = vector.shape_cast %45 : vector<8x8xi1> to vector<1x8x8xi1>
    %c0_16 = arith.constant 0 : index
    %c0_17 = arith.constant 0 : index
    %47 = vector.load %arg7[%c0_16, %c0_17] : memref<1x128xf32, #tpu.memory_space<vmem>>, vector<1x128xf32>
    %48 = vector.shape_cast %47 : vector<1x128xf32> to vector<1x128xf32>
    %49 = vector.broadcast %48 : vector<1x128xf32> to vector<8x128xf32>
    %50 = vector.extract_strided_slice %39 {offsets = [0, 0, 0], sizes = [1, 8, 32], strides = [1, 1, 1]} : vector<1x8x128xbf16> to vector<1x8x32xbf16>
    %51 = vector.extract_strided_slice %34 {offsets = [0, 0, 0], sizes = [1, 8, 32], strides = [1, 1, 1]} : vector<1x8x128xbf16> to vector<1x8x32xbf16>
    %52 = vector.extract_strided_slice %42 {offsets = [0, 0, 0], sizes = [1, 8, 32], strides = [1, 1, 1]} : vector<1x8x128xbf16> to vector<1x8x32xbf16>
    "tpu.trace_start"() <{level = 10 : i32, message = "btd,bsd->bts"}> : () -> ()
    %cst_18 = arith.constant dense<0.000000e+00> : vector<1x8x8xf32>
    %53 = tpu.matmul %50, %51, %cst_18 {dimension_numbers = #tpu.dot_dimension_numbers<[2], [2], [1], [1], [0, 0, 0, 1, 1, 1], [0], [0]>} : vector<1x8x32xbf16>, vector<1x8x32xbf16>, vector<1x8x8xf32> -> vector<1x8x8xf32>
    %cst_19 = arith.constant -1.000000e+30 : f32
    "tpu.trace_stop"() : () -> ()
    %54 = vector.broadcast %cst_19 : f32 to vector<1x8x8xf32>
    %55 = arith.select %46, %53, %54 : vector<1x8x8xi1>, vector<1x8x8xf32>
    %cst_20 = arith.constant dense<0xFF800000> : vector<1x8xf32>
    %56 = vector.multi_reduction <maximumf>, %55, %cst_20 [2] : vector<1x8x8xf32> to vector<1x8xf32>
    %57 = vector.shape_cast %56 : vector<1x8xf32> to vector<1x8x1xf32>
    %58 = vector.broadcast %57 : vector<1x8x1xf32> to vector<1x8x8xf32>
    %59 = arith.subf %55, %58 : vector<1x8x8xf32>
    %60 = math.exp %59 : vector<1x8x8xf32>
    %cst_21 = arith.constant dense<0.000000e+00> : vector<1x8xf32>
    %61 = vector.multi_reduction <add>, %60, %cst_21 [2] : vector<1x8x8xf32> to vector<1x8xf32>
    %62 = vector.shape_cast %61 : vector<1x8xf32> to vector<1x8x1xf32>
    %63 = tpu.reciprocal %62 {approx = true} : vector<1x8x1xf32> -> vector<1x8x1xf32>
    %64 = vector.broadcast %63 : vector<1x8x1xf32> to vector<1x8x8xf32>
    %65 = arith.mulf %60, %64 : vector<1x8x8xf32>
    %66 = arith.truncf %65 : vector<1x8x8xf32> to vector<1x8x8xbf16>
    "tpu.trace_start"() <{level = 10 : i32, message = "bts,bsd->btd"}> : () -> ()
    %cst_22 = arith.constant dense<0.000000e+00> : vector<1x8x32xf32>
    %67 = tpu.matmul %66, %52, %cst_22 {dimension_numbers = #tpu.dot_dimension_numbers<[2], [1], [1], [2], [0, 0, 0, 1, 1, 2], [0], [0]>} : vector<1x8x8xbf16>, vector<1x8x32xbf16>, vector<1x8x32xf32> -> vector<1x8x32xf32>
    "tpu.trace_stop"() : () -> ()
    %68 = vector.shape_cast %67 : vector<1x8x32xf32> to vector<8x32xf32>
    %69 = arith.truncf %68 : vector<8x32xf32> to vector<8x32xbf16>
    %c0_23 = arith.constant 0 : index
    %c0_24 = arith.constant 0 : index
    %70 = vector.load %arg6[%c0_23, %c0_24] : memref<128x128xbf16, #tpu.memory_space<vmem>>, vector<32x128xbf16>
    %cst_25 = arith.constant dense<0.000000e+00> : vector<8x128xf32>
    %71 = tpu.matmul %69, %70, %cst_25 {dimension_numbers = #tpu.dot_dimension_numbers<[1], [0], [0], [1], [0, 0, 1, 1], [], []>} : vector<8x32xbf16>, vector<32x128xbf16>, vector<8x128xf32> -> vector<8x128xf32>
    %72 = arith.addf %49, %71 : vector<8x128xf32>
    %73 = vector.extract_strided_slice %39 {offsets = [0, 0, 32], sizes = [1, 8, 32], strides = [1, 1, 1]} : vector<1x8x128xbf16> to vector<1x8x32xbf16>
    %74 = vector.extract_strided_slice %34 {offsets = [0, 0, 32], sizes = [1, 8, 32], strides = [1, 1, 1]} : vector<1x8x128xbf16> to vector<1x8x32xbf16>
    %75 = vector.extract_strided_slice %42 {offsets = [0, 0, 32], sizes = [1, 8, 32], strides = [1, 1, 1]} : vector<1x8x128xbf16> to vector<1x8x32xbf16>
    "tpu.trace_start"() <{level = 10 : i32, message = "btd,bsd->bts"}> : () -> ()
    %cst_26 = arith.constant dense<0.000000e+00> : vector<1x8x8xf32>
    %76 = tpu.matmul %73, %74, %cst_26 {dimension_numbers = #tpu.dot_dimension_numbers<[2], [2], [1], [1], [0, 0, 0, 1, 1, 1], [0], [0]>} : vector<1x8x32xbf16>, vector<1x8x32xbf16>, vector<1x8x8xf32> -> vector<1x8x8xf32>
    %cst_27 = arith.constant -1.000000e+30 : f32
    "tpu.trace_stop"() : () -> ()
    %77 = vector.broadcast %cst_27 : f32 to vector<1x8x8xf32>
    %78 = arith.select %46, %76, %77 : vector<1x8x8xi1>, vector<1x8x8xf32>
    %cst_28 = arith.constant dense<0xFF800000> : vector<1x8xf32>
    %79 = vector.multi_reduction <maximumf>, %78, %cst_28 [2] : vector<1x8x8xf32> to vector<1x8xf32>
    %80 = vector.shape_cast %79 : vector<1x8xf32> to vector<1x8x1xf32>
    %81 = vector.broadcast %80 : vector<1x8x1xf32> to vector<1x8x8xf32>
    %82 = arith.subf %78, %81 : vector<1x8x8xf32>
    %83 = math.exp %82 : vector<1x8x8xf32>
    %cst_29 = arith.constant dense<0.000000e+00> : vector<1x8xf32>
    %84 = vector.multi_reduction <add>, %83, %cst_29 [2] : vector<1x8x8xf32> to vector<1x8xf32>
    %85 = vector.shape_cast %84 : vector<1x8xf32> to vector<1x8x1xf32>
    %86 = tpu.reciprocal %85 {approx = true} : vector<1x8x1xf32> -> vector<1x8x1xf32>
    %87 = vector.broadcast %86 : vector<1x8x1xf32> to vector<1x8x8xf32>
    %88 = arith.mulf %83, %87 : vector<1x8x8xf32>
    %89 = arith.truncf %88 : vector<1x8x8xf32> to vector<1x8x8xbf16>
    "tpu.trace_start"() <{level = 10 : i32, message = "bts,bsd->btd"}> : () -> ()
    %cst_30 = arith.constant dense<0.000000e+00> : vector<1x8x32xf32>
    %90 = tpu.matmul %89, %75, %cst_30 {dimension_numbers = #tpu.dot_dimension_numbers<[2], [1], [1], [2], [0, 0, 0, 1, 1, 2], [0], [0]>} : vector<1x8x8xbf16>, vector<1x8x32xbf16>, vector<1x8x32xf32> -> vector<1x8x32xf32>
    "tpu.trace_stop"() : () -> ()
    %91 = vector.shape_cast %90 : vector<1x8x32xf32> to vector<8x32xf32>
    %92 = arith.truncf %91 : vector<8x32xf32> to vector<8x32xbf16>
    %c32 = arith.constant 32 : index
    %c0_31 = arith.constant 0 : index
    %93 = vector.load %arg6[%c32, %c0_31] : memref<128x128xbf16, #tpu.memory_space<vmem>>, vector<32x128xbf16>
    %cst_32 = arith.constant dense<0.000000e+00> : vector<8x128xf32>
    %94 = tpu.matmul %92, %93, %cst_32 {dimension_numbers = #tpu.dot_dimension_numbers<[1], [0], [0], [1], [0, 0, 1, 1], [], []>} : vector<8x32xbf16>, vector<32x128xbf16>, vector<8x128xf32> -> vector<8x128xf32>
    %95 = arith.addf %72, %94 : vector<8x128xf32>
    %96 = vector.extract_strided_slice %39 {offsets = [0, 0, 64], sizes = [1, 8, 32], strides = [1, 1, 1]} : vector<1x8x128xbf16> to vector<1x8x32xbf16>
    %97 = vector.extract_strided_slice %34 {offsets = [0, 0, 64], sizes = [1, 8, 32], strides = [1, 1, 1]} : vector<1x8x128xbf16> to vector<1x8x32xbf16>
    %98 = vector.extract_strided_slice %42 {offsets = [0, 0, 64], sizes = [1, 8, 32], strides = [1, 1, 1]} : vector<1x8x128xbf16> to vector<1x8x32xbf16>
    "tpu.trace_start"() <{level = 10 : i32, message = "btd,bsd->bts"}> : () -> ()
    %cst_33 = arith.constant dense<0.000000e+00> : vector<1x8x8xf32>
    %99 = tpu.matmul %96, %97, %cst_33 {dimension_numbers = #tpu.dot_dimension_numbers<[2], [2], [1], [1], [0, 0, 0, 1, 1, 1], [0], [0]>} : vector<1x8x32xbf16>, vector<1x8x32xbf16>, vector<1x8x8xf32> -> vector<1x8x8xf32>
    %cst_34 = arith.constant -1.000000e+30 : f32
    "tpu.trace_stop"() : () -> ()
    %100 = vector.broadcast %cst_34 : f32 to vector<1x8x8xf32>
    %101 = arith.select %46, %99, %100 : vector<1x8x8xi1>, vector<1x8x8xf32>
    %cst_35 = arith.constant dense<0xFF800000> : vector<1x8xf32>
    %102 = vector.multi_reduction <maximumf>, %101, %cst_35 [2] : vector<1x8x8xf32> to vector<1x8xf32>
    %103 = vector.shape_cast %102 : vector<1x8xf32> to vector<1x8x1xf32>
    %104 = vector.broadcast %103 : vector<1x8x1xf32> to vector<1x8x8xf32>
    %105 = arith.subf %101, %104 : vector<1x8x8xf32>
    %106 = math.exp %105 : vector<1x8x8xf32>
    %cst_36 = arith.constant dense<0.000000e+00> : vector<1x8xf32>
    %107 = vector.multi_reduction <add>, %106, %cst_36 [2] : vector<1x8x8xf32> to vector<1x8xf32>
    %108 = vector.shape_cast %107 : vector<1x8xf32> to vector<1x8x1xf32>
    %109 = tpu.reciprocal %108 {approx = true} : vector<1x8x1xf32> -> vector<1x8x1xf32>
    %110 = vector.broadcast %109 : vector<1x8x1xf32> to vector<1x8x8xf32>
    %111 = arith.mulf %106, %110 : vector<1x8x8xf32>
    %112 = arith.truncf %111 : vector<1x8x8xf32> to vector<1x8x8xbf16>
    "tpu.trace_start"() <{level = 10 : i32, message = "bts,bsd->btd"}> : () -> ()
    %cst_37 = arith.constant dense<0.000000e+00> : vector<1x8x32xf32>
    %113 = tpu.matmul %112, %98, %cst_37 {dimension_numbers = #tpu.dot_dimension_numbers<[2], [1], [1], [2], [0, 0, 0, 1, 1, 2], [0], [0]>} : vector<1x8x8xbf16>, vector<1x8x32xbf16>, vector<1x8x32xf32> -> vector<1x8x32xf32>
    "tpu.trace_stop"() : () -> ()
    %114 = vector.shape_cast %113 : vector<1x8x32xf32> to vector<8x32xf32>
    %115 = arith.truncf %114 : vector<8x32xf32> to vector<8x32xbf16>
    %c64 = arith.constant 64 : index
    %c0_38 = arith.constant 0 : index
    %116 = vector.load %arg6[%c64, %c0_38] : memref<128x128xbf16, #tpu.memory_space<vmem>>, vector<32x128xbf16>
    %cst_39 = arith.constant dense<0.000000e+00> : vector<8x128xf32>
    %117 = tpu.matmul %115, %116, %cst_39 {dimension_numbers = #tpu.dot_dimension_numbers<[1], [0], [0], [1], [0, 0, 1, 1], [], []>} : vector<8x32xbf16>, vector<32x128xbf16>, vector<8x128xf32> -> vector<8x128xf32>
    %118 = arith.addf %95, %117 : vector<8x128xf32>
    %119 = vector.extract_strided_slice %39 {offsets = [0, 0, 96], sizes = [1, 8, 32], strides = [1, 1, 1]} : vector<1x8x128xbf16> to vector<1x8x32xbf16>
    %120 = vector.extract_strided_slice %34 {offsets = [0, 0, 96], sizes = [1, 8, 32], strides = [1, 1, 1]} : vector<1x8x128xbf16> to vector<1x8x32xbf16>
    %121 = vector.extract_strided_slice %42 {offsets = [0, 0, 96], sizes = [1, 8, 32], strides = [1, 1, 1]} : vector<1x8x128xbf16> to vector<1x8x32xbf16>
    "tpu.trace_start"() <{level = 10 : i32, message = "btd,bsd->bts"}> : () -> ()
    %cst_40 = arith.constant dense<0.000000e+00> : vector<1x8x8xf32>
    %122 = tpu.matmul %119, %120, %cst_40 {dimension_numbers = #tpu.dot_dimension_numbers<[2], [2], [1], [1], [0, 0, 0, 1, 1, 1], [0], [0]>} : vector<1x8x32xbf16>, vector<1x8x32xbf16>, vector<1x8x8xf32> -> vector<1x8x8xf32>
    %cst_41 = arith.constant -1.000000e+30 : f32
    "tpu.trace_stop"() : () -> ()
    %123 = vector.broadcast %cst_41 : f32 to vector<1x8x8xf32>
    %124 = arith.select %46, %122, %123 : vector<1x8x8xi1>, vector<1x8x8xf32>
    %cst_42 = arith.constant dense<0xFF800000> : vector<1x8xf32>
    %125 = vector.multi_reduction <maximumf>, %124, %cst_42 [2] : vector<1x8x8xf32> to vector<1x8xf32>
    %126 = vector.shape_cast %125 : vector<1x8xf32> to vector<1x8x1xf32>
    %127 = vector.broadcast %126 : vector<1x8x1xf32> to vector<1x8x8xf32>
    %128 = arith.subf %124, %127 : vector<1x8x8xf32>
    %129 = math.exp %128 : vector<1x8x8xf32>
    %cst_43 = arith.constant dense<0.000000e+00> : vector<1x8xf32>
    %130 = vector.multi_reduction <add>, %129, %cst_43 [2] : vector<1x8x8xf32> to vector<1x8xf32>
    %131 = vector.shape_cast %130 : vector<1x8xf32> to vector<1x8x1xf32>
    %132 = tpu.reciprocal %131 {approx = true} : vector<1x8x1xf32> -> vector<1x8x1xf32>
    %133 = vector.broadcast %132 : vector<1x8x1xf32> to vector<1x8x8xf32>
    %134 = arith.mulf %129, %133 : vector<1x8x8xf32>
    %135 = arith.truncf %134 : vector<1x8x8xf32> to vector<1x8x8xbf16>
    "tpu.trace_start"() <{level = 10 : i32, message = "bts,bsd->btd"}> : () -> ()
    %cst_44 = arith.constant dense<0.000000e+00> : vector<1x8x32xf32>
    %136 = tpu.matmul %135, %121, %cst_44 {dimension_numbers = #tpu.dot_dimension_numbers<[2], [1], [1], [2], [0, 0, 0, 1, 1, 2], [0], [0]>} : vector<1x8x8xbf16>, vector<1x8x32xbf16>, vector<1x8x32xf32> -> vector<1x8x32xf32>
    "tpu.trace_stop"() : () -> ()
    %137 = vector.shape_cast %136 : vector<1x8x32xf32> to vector<8x32xf32>
    %138 = arith.truncf %137 : vector<8x32xf32> to vector<8x32xbf16>
    %c96 = arith.constant 96 : index
    %c0_45 = arith.constant 0 : index
    %139 = vector.load %arg6[%c96, %c0_45] : memref<128x128xbf16, #tpu.memory_space<vmem>>, vector<32x128xbf16>
    %cst_46 = arith.constant dense<0.000000e+00> : vector<8x128xf32>
    %140 = tpu.matmul %138, %139, %cst_46 {dimension_numbers = #tpu.dot_dimension_numbers<[1], [0], [0], [1], [0, 0, 1, 1], [], []>} : vector<8x32xbf16>, vector<32x128xbf16>, vector<8x128xf32> -> vector<8x128xf32>
    %141 = arith.addf %118, %140 : vector<8x128xf32>
    %142 = vector.shape_cast %141 : vector<8x128xf32> to vector<1x8x128xf32>
    %143 = arith.addf %0, %142 : vector<1x8x128xf32>
    %c0_47 = arith.constant 0 : index
    %c0_48 = arith.constant 0 : index
    %144 = vector.load %arg8[%c0_47, %c0_48] : memref<1x128xf32, #tpu.memory_space<vmem>>, vector<1x128xf32>
    %c0_49 = arith.constant 0 : index
    %c0_50 = arith.constant 0 : index
    %145 = vector.load %arg9[%c0_49, %c0_50] : memref<1x128xf32, #tpu.memory_space<vmem>>, vector<1x128xf32>
    %cst_51 = arith.constant dense<0.000000e+00> : vector<1x128xf32>
    %146 = vector.multi_reduction <add>, %143, %cst_51 [1] : vector<1x8x128xf32> to vector<1x128xf32>
    %147 = vector.shape_cast %146 : vector<1x128xf32> to vector<1x1x128xf32>
    %cst_52 = arith.constant 8.000000e+00 : f32
    %148 = vector.broadcast %cst_52 : f32 to vector<1x1x128xf32>
    %149 = arith.divf %147, %148 : vector<1x1x128xf32>
    %150 = vector.broadcast %149 : vector<1x1x128xf32> to vector<1x8x128xf32>
    %151 = arith.subf %143, %150 : vector<1x8x128xf32>
    %152 = arith.mulf %151, %151 : vector<1x8x128xf32>
    %cst_53 = arith.constant dense<0.000000e+00> : vector<1x128xf32>
    %153 = vector.multi_reduction <add>, %152, %cst_53 [1] : vector<1x8x128xf32> to vector<1x128xf32>
    %154 = vector.shape_cast %153 : vector<1x128xf32> to vector<1x1x128xf32>
    %cst_54 = arith.constant 0.142857149 : f32
    %155 = vector.broadcast %cst_54 : f32 to vector<1x1x128xf32>
    %156 = arith.mulf %154, %155 : vector<1x1x128xf32>
    %cst_55 = arith.constant 9.99999974E-6 : f32
    %157 = vector.broadcast %cst_55 : f32 to vector<1x1x128xf32>
    %158 = arith.addf %156, %157 : vector<1x1x128xf32>
    %159 = math.rsqrt %158 : vector<1x1x128xf32>
    %160 = vector.broadcast %159 : vector<1x1x128xf32> to vector<1x8x128xf32>
    %161 = arith.mulf %151, %160 : vector<1x8x128xf32>
    %162 = vector.shape_cast %144 : vector<1x128xf32> to vector<1x1x128xf32>
    %163 = vector.broadcast %162 : vector<1x1x128xf32> to vector<1x8x128xf32>
    %164 = arith.mulf %163, %161 : vector<1x8x128xf32>
    %165 = vector.shape_cast %145 : vector<1x128xf32> to vector<1x1x128xf32>
    %166 = vector.broadcast %165 : vector<1x1x128xf32> to vector<1x8x128xf32>
    %167 = arith.addf %164, %166 : vector<1x8x128xf32>
    %168 = vector.shape_cast %167 : vector<1x8x128xf32> to vector<8x128xf32>
    %169 = arith.truncf %168 : vector<8x128xf32> to vector<8x128xbf16>
    %c0_56 = arith.constant 0 : index
    %c0_57 = arith.constant 0 : index
    %170 = vector.load %arg10[%c0_56, %c0_57] : memref<128x512xbf16, #tpu.memory_space<vmem>>, vector<128x512xbf16>
    %cst_58 = arith.constant dense<0.000000e+00> : vector<8x512xf32>
    %171 = tpu.matmul %169, %170, %cst_58 {dimension_numbers = #tpu.dot_dimension_numbers<[1], [0], [0], [1], [0, 0, 1, 1], [], []>} : vector<8x128xbf16>, vector<128x512xbf16>, vector<8x512xf32> -> vector<8x512xf32>
    %c0_59 = arith.constant 0 : index
    %c0_60 = arith.constant 0 : index
    %172 = vector.load %arg11[%c0_59, %c0_60] : memref<1x512xf32, #tpu.memory_space<vmem>>, vector<1x512xf32>
    %173 = vector.broadcast %172 : vector<1x512xf32> to vector<8x512xf32>
    %174 = arith.addf %171, %173 : vector<8x512xf32>
    %cst_61 = arith.constant 0.000000e+00 : f32
    %175 = vector.broadcast %cst_61 : f32 to vector<8x512xf32>
    %176 = arith.maximumf %174, %175 : vector<8x512xf32>
    %177 = arith.truncf %176 : vector<8x512xf32> to vector<8x512xbf16>
    %c0_62 = arith.constant 0 : index
    %c0_63 = arith.constant 0 : index
    %178 = vector.load %arg12[%c0_62, %c0_63] : memref<512x128xbf16, #tpu.memory_space<vmem>>, vector<512x128xbf16>
    %cst_64 = arith.constant dense<0.000000e+00> : vector<8x128xf32>
    %179 = tpu.matmul %177, %178, %cst_64 {dimension_numbers = #tpu.dot_dimension_numbers<[1], [0], [0], [1], [0, 0, 1, 1], [], []>} : vector<8x512xbf16>, vector<512x128xbf16>, vector<8x128xf32> -> vector<8x128xf32>
    %c0_65 = arith.constant 0 : index
    %c0_66 = arith.constant 0 : index
    %180 = vector.load %arg13[%c0_65, %c0_66] : memref<1x128xf32, #tpu.memory_space<vmem>>, vector<1x128xf32>
    %181 = vector.broadcast %180 : vector<1x128xf32> to vector<8x128xf32>
    %182 = arith.addf %179, %181 : vector<8x128xf32>
    %183 = vector.shape_cast %182 : vector<8x128xf32> to vector<1x8x128xf32>
    %184 = arith.addf %143, %183 : vector<1x8x128xf32>
    %c0_67 = arith.constant 0 : index
    %c0_68 = arith.constant 0 : index
    %c0_69 = arith.constant 0 : index
    %185 = vector.load %arg14[%c0_67, %c0_68, %c0_69] : memref<1x8x128xf32, #tpu.memory_space<vmem>>, vector<1x8x128xf32>
    tpu.vector_store %arg14[%c0_67, %c0_68, %c0_69], %184 {strides = array<i32>} : memref<1x8x128xf32, #tpu.memory_space<vmem>>, vector<1x8x128xf32>,
    return
  }
  func.func @transform_0(%arg0: i32) -> (i32, i32, i32) {
    %c0_i32 = arith.constant 0 : i32
    %c0_i32_0 = arith.constant 0 : i32
    %c0_i32_1 = arith.constant 0 : i32
    return %arg0, %c0_i32, %c0_i32_0 : i32, i32, i32
  }
  func.func @transform_1(%arg0: i32) -> (i32, i32) {
    %c0_i32 = arith.constant 0 : i32
    %c0_i32_0 = arith.constant 0 : i32
    %c0_i32_1 = arith.constant 0 : i32
    return %c0_i32, %c0_i32_0 : i32, i32
  }
  func.func @transform_2(%arg0: i32) -> (i32, i32) {
    %c0_i32 = arith.constant 0 : i32
    %c0_i32_0 = arith.constant 0 : i32
    %c0_i32_1 = arith.constant 0 : i32
    return %c0_i32, %c0_i32_0 : i32, i32
  }
  func.func @transform_3(%arg0: i32) -> (i32, i32) {
    %c0_i32 = arith.constant 0 : i32
    %c0_i32_0 = arith.constant 0 : i32
    %c0_i32_1 = arith.constant 0 : i32
    return %c0_i32, %c0_i32_0 : i32, i32
  }
  func.func @transform_4(%arg0: i32) -> (i32, i32) {
    %c0_i32 = arith.constant 0 : i32
    %c0_i32_0 = arith.constant 0 : i32
    %c0_i32_1 = arith.constant 0 : i32
    return %c0_i32, %c0_i32_0 : i32, i32
  }
  func.func @transform_5(%arg0: i32) -> (i32, i32) {
    %c0_i32 = arith.constant 0 : i32
    %c0_i32_0 = arith.constant 0 : i32
    %c0_i32_1 = arith.constant 0 : i32
    return %c0_i32, %c0_i32_0 : i32, i32
  }
  func.func @transform_6(%arg0: i32) -> (i32, i32) {
    %c0_i32 = arith.constant 0 : i32
    %c0_i32_0 = arith.constant 0 : i32
    %c0_i32_1 = arith.constant 0 : i32
    return %c0_i32, %c0_i32_0 : i32, i32
  }
  func.func @transform_7(%arg0: i32) -> (i32, i32) {
    %c0_i32 = arith.constant 0 : i32
    %c0_i32_0 = arith.constant 0 : i32
    %c0_i32_1 = arith.constant 0 : i32
    return %c0_i32, %c0_i32_0 : i32, i32
  }
  func.func @transform_8(%arg0: i32) -> (i32, i32) {
    %c0_i32 = arith.constant 0 : i32
    %c0_i32_0 = arith.constant 0 : i32
    %c0_i32_1 = arith.constant 0 : i32
    return %c0_i32, %c0_i32_0 : i32, i32
  }
  func.func @transform_9(%arg0: i32) -> (i32, i32) {
    %c0_i32 = arith.constant 0 : i32
    %c0_i32_0 = arith.constant 0 : i32
    %c0_i32_1 = arith.constant 0 : i32
    return %c0_i32, %c0_i32_0 : i32, i32
  }
  func.func @transform_10(%arg0: i32) -> (i32, i32) {
    %c0_i32 = arith.constant 0 : i32
    %c0_i32_0 = arith.constant 0 : i32
    %c0_i32_1 = arith.constant 0 : i32
    return %c0_i32, %c0_i32_0 : i32, i32
  }
  func.func @transform_11(%arg0: i32) -> (i32, i32) {
    %c0_i32 = arith.constant 0 : i32
    %c0_i32_0 = arith.constant 0 : i32
    %c0_i32_1 = arith.constant 0 : i32
    return %c0_i32, %c0_i32_0 : i32, i32
  }
  func.func @transform_12(%arg0: i32) -> (i32, i32) {
    %c0_i32 = arith.constant 0 : i32
    %c0_i32_0 = arith.constant 0 : i32
    %c0_i32_1 = arith.constant 0 : i32
    return %c0_i32, %c0_i32_0 : i32, i32
  }
  func.func @transform_13(%arg0: i32) -> (i32, i32, i32) {
    %c0_i32 = arith.constant 0 : i32
    %c0_i32_0 = arith.constant 0 : i32
    %c0_i32_1 = arith.constant 0 : i32
    return %arg0, %c0_i32, %c0_i32_0 : i32, i32, i32
  }
}

</mosaic_0001>

<llo_original>
// kernel: tpu_custom_call.1
$region0: #{tpu_custom_call.1}
  #allocation0 [shape = 'u32[]', space=smem, size = 0x4, offset = 0x4, fixed_abs, tag = 'smem constant byte address 0x4 - core index']
  #allocation1 [shape = 'u32[144,128]{1,0:T(1,128)}', space=vmem, size = 0x12000, scoped, tag = 'internal scratch']
  %s0 = inlined_call_operand.hbm [shape: f32[2,8,128], index: 0, kind: input, shape index: {}]
  %s1 = inlined_call_operand.hbm [shape: f32[1,128], index: 1, kind: input, shape index: {}]
  %s2 = inlined_call_operand.hbm [shape: f32[1,128], index: 2, kind: input, shape index: {}]
  %s3 = inlined_call_operand.hbm [shape: bf16[128,384], index: 3, kind: input, shape index: {}]
  %s4 = inlined_call_operand.vmem [shape: f32[1,384], index: 4, kind: input, shape index: {}]
  %s5 = inlined_call_operand.hbm [shape: bf16[128,128], index: 5, kind: input, shape index: {}]
  %s6 = inlined_call_operand.vmem [shape: f32[1,128], index: 6, kind: input, shape index: {}]
  %s7 = inlined_call_operand.vmem [shape: f32[1,128], index: 7, kind: input, shape index: {}]
  %s8 = inlined_call_operand.vmem [shape: f32[1,128], index: 8, kind: input, shape index: {}]
  %s9 = inlined_call_operand.hbm [shape: bf16[128,512], index: 9, kind: input, shape index: {}]
  %s10 = inlined_call_operand.vmem [shape: f32[1,512], index: 10, kind: input, shape index: {}]
  %s11 = inlined_call_operand.hbm [shape: bf16[512,128], index: 11, kind: input, shape index: {}]
  %s12 = inlined_call_operand.vmem [shape: f32[1,128], index: 12, kind: input, shape index: {}]
  %s13 = inlined_call_operand.hbm [shape: f32[2,8,128], index: 13, kind: output, shape index: {}]
  %s14 = sld [smem:[#allocation0]]
  $region113: #{tpu_custom_call.1} parent=0
    _
  %s16 = ssub.s32 1, %s14
  %s17 = scalar_select 0, %s16, %s14
  $region1: #{tpu_custom_call.1} parent=0
    #allocation2 [shape = 'u8[8192]{0}', space=vmem, size = 0x2000, scoped, tag = 'input window, operand 0']
    #allocation3 [shape = 's32[2]{0}', space=sflag, size = 0x8, scoped, tag = 'scoped memory for tpu_custom_call.1']
    #allocation4 [shape = 's32[2]{0}', space=sflag, size = 0x8, scoped, tag = 'scoped memory for tpu_custom_call.1']
    #allocation5 [shape = 'u8[512]{0}', space=vmem, size = 0x400, scoped, tag = 'input window, operand 1, single buffered']
    #allocation6 [shape = 's32[1]{0}', space=sflag, size = 0x4, scoped, tag = 'scoped memory for tpu_custom_call.1']
    #allocation7 [shape = 'u8[512]{0}', space=vmem, size = 0x400, scoped, tag = 'input window, operand 2, single buffered']
    #allocation8 [shape = 'u8[98304]{0}', space=vmem, size = 0x18000, scoped, tag = 'input window, operand 3, single buffered']
    #allocation9 [shape = 's32[1]{0}', space=sflag, size = 0x4, scoped, tag = 'scoped memory for tpu_custom_call.1']
    #allocation10 [shape = 'u8[32768]{0}', space=vmem, size = 0x8000, scoped, tag = 'input window, operand 5, single buffered']
    #allocation11 [shape = 'u8[131072]{0}', space=vmem, size = 0x20000, scoped, tag = 'input window, operand 9, single buffered']
    #allocation12 [shape = 's32[1]{0}', space=sflag, size = 0x4, scoped, tag = 'scoped memory for tpu_custom_call.1']
    #allocation13 [shape = 'u8[131072]{0}', space=vmem, size = 0x20000, scoped, tag = 'input window, operand 11, single buffered']
    #allocation14 [shape = 'u8[8192]{0}', space=vmem, size = 0x2000, scoped, tag = 'output window, operand 0']
    %18 = vsyncpa [#allocation3], 0
    %s19 = scalar_lea.sflag [#allocation3], 1
    %20 = vsyncpa %s19, 0
    %21 = vsyncpa [#allocation6], 0
    %22 = vsyncpa [#allocation9], 0
    %23 = vsyncpa [#allocation12], 0
    %24 = vsyncpa [#allocation4], 0
    %s25 = scalar_lea.sflag [#allocation4], 1
    %26 = vsyncpa %s25, 0
    loop: start=0, step=1, limit=4
    $region2: #{tpu_custom_call.1} parent=1 // loop_pre_header
      _
    $region3: #{tpu_custom_call.1} parent=1 // loop_header
      %s28 = sphi 0, %s32
      %p29 = scmp.ge.s32.totalorder %s28, 4
      %s38 = sphi 0, %s40
      %s41 = sphi 0, %s38
      %s42 = sphi 0, %s41
      %s58 = sphi 0, %s42
      %s62 = sphi 0, %s62
      %s64 = sphi 0, %s62
      %s65 = sphi 0, %s64
      %s79 = sphi 0, %s65
      %s83 = sphi 0, %s83
      %s85 = sphi 0, %s83
      %s86 = sphi 0, %s85
      %s100 = sphi 0, %s86
      %s104 = sphi 0, %s104
      %s106 = sphi 0, %s104
      %s107 = sphi 0, %s106
      %s121 = sphi 0, %s107
      %s125 = sphi 0, %s125
      %s127 = sphi 0, %s125
      %s128 = sphi 0, %s127
      %s142 = sphi 0, %s128
      %s146 = sphi 0, %s146
      %s148 = sphi 0, %s146
      %s149 = sphi 0, %s148
      %s163 = sphi 0, %s149
      %s167 = sphi 0, %s167
      %s169 = sphi 0, %s167
      %s170 = sphi 0, %s169
      %s184 = sphi 0, %s170
      %s188 = sphi 0, %s188
      %s190 = sphi 0, %s188
      %s191 = sphi 0, %s190
      %s205 = sphi 0, %s191
      %s209 = sphi 0, %s209
      %s211 = sphi 0, %s209
      %s212 = sphi 0, %s211
      %s226 = sphi 0, %s212
      %s230 = sphi 0, %s230
      %s232 = sphi 0, %s230
      %s233 = sphi 0, %s232
      %s247 = sphi 0, %s233
      %s251 = sphi 0, %s251
      %s253 = sphi 0, %s251
      %s254 = sphi 0, %s253
      %s268 = sphi 0, %s254
      %s272 = sphi 0, %s272
      %s274 = sphi 0, %s272
      %s275 = sphi 0, %s274
      %s289 = sphi 0, %s275
      %s293 = sphi 0, %s293
      %s295 = sphi 0, %s293
      %s296 = sphi 0, %s295
      %s310 = sphi 0, %s296
      %s316 = sphi 0, %s318
      %s319 = sphi 0, %s316
      %s320 = sphi 0, %s319
      %s336 = sphi 0, %s320
    $region4: #{tpu_custom_call.1} parent=1 // loop_header_branch
      %31 = sbr.rel (%p29) target = $region8
    $region5: #{tpu_custom_call.1} parent=1 // loop_body
      %s33 = ssub.s32 %s28, 1
      %s34 = ssub.s32 %s28, 2
      %s35 = sadd.s32 %s28, 1
      %s36 = ssub.s32 %s28, %s35
      %p37 = scmp.eq.s32.totalorder %s36, 0
      %s39 = sadd.s32 %s38, 1
      %s40 = scalar_select %p37, %s38, %s39
      %p43 = pneg %p37
      %p44 = scmp.eq.s32.totalorder %s28, 1
      %p45 = por %p43, %p44
      %p46 = scmp.ne.s32.totalorder %s38, %s41
      %p47 = scmp.eq.s32.totalorder %s28, 0
      %p48 = por %p46, %p47
      %p49 = scmp.ne.s32.totalorder %s38, %s41
      %p50 = scmp.eq.s32.totalorder %s33, 1
      %p51 = por %p49, %p50
      %p52 = scmp.ne.s32.totalorder %s41, %s42
      %p53 = scmp.eq.s32.totalorder %s33, 0
      %p54 = por %p52, %p53
      %p55 = scmp.ne.s32.totalorder %s41, %s42
      %p56 = scmp.eq.s32.totalorder %s34, 1
      %p57 = por %p55, %p56
      %p59 = scmp.ne.s32.totalorder %s42, %s58
      %p60 = scmp.eq.s32.totalorder %s34, 0
      %p61 = por %p59, %p60
      %s63 = sadd.s32 %s62, 1
      %p66 = scmp.eq.s32.totalorder %s28, 1
      %p67 = scmp.ne.s32.totalorder %s62, %s64
      %p68 = scmp.eq.s32.totalorder %s28, 0
      %p69 = por %p67, %p68
      %p70 = scmp.ne.s32.totalorder %s62, %s64
      %p71 = scmp.eq.s32.totalorder %s33, 1
      %p72 = por %p70, %p71
      %p73 = scmp.ne.s32.totalorder %s64, %s65
      %p74 = scmp.eq.s32.totalorder %s33, 0
      %p75 = por %p73, %p74
      %p76 = scmp.ne.s32.totalorder %s64, %s65
      %p77 = scmp.eq.s32.totalorder %s34, 1
      %p78 = por %p76, %p77
      %p80 = scmp.ne.s32.totalorder %s65, %s79
      %p81 = scmp.eq.s32.totalorder %s34, 0
      %p82 = por %p80, %p81
      %s84 = sadd.s32 %s83, 1
      %p87 = scmp.eq.s32.totalorder %s28, 1
      %p88 = scmp.ne.s32.totalorder %s83, %s85
      %p89 = scmp.eq.s32.totalorder %s28, 0
      %p90 = por %p88, %p89
      %p91 = scmp.ne.s32.totalorder %s83, %s85
      %p92 = scmp.eq.s32.totalorder %s33, 1
      %p93 = por %p91, %p92
      %p94 = scmp.ne.s32.totalorder %s85, %s86
      %p95 = scmp.eq.s32.totalorder %s33, 0
      %p96 = por %p94, %p95
      %p97 = scmp.ne.s32.totalorder %s85, %s86
      %p98 = scmp.eq.s32.totalorder %s34, 1
      %p99 = por %p97, %p98
      %p101 = scmp.ne.s32.totalorder %s86, %s100
      %p102 = scmp.eq.s32.totalorder %s34, 0
      %p103 = por %p101, %p102
      %s105 = sadd.s32 %s104, 1
      %p108 = scmp.eq.s32.totalorder %s28, 1
      %p109 = scmp.ne.s32.totalorder %s104, %s106
      %p110 = scmp.eq.s32.totalorder %s28, 0
      %p111 = por %p109, %p110
      %p112 = scmp.ne.s32.totalorder %s104, %s106
      %p113 = scmp.eq.s32.totalorder %s33, 1
      %p114 = por %p112, %p113
      %p115 = scmp.ne.s32.totalorder %s106, %s107
      %p116 = scmp.eq.s32.totalorder %s33, 0
      %p117 = por %p115, %p116
      %p118 = scmp.ne.s32.totalorder %s106, %s107
      %p119 = scmp.eq.s32.totalorder %s34, 1
      %p120 = por %p118, %p119
      %p122 = scmp.ne.s32.totalorder %s107, %s121
      %p123 = scmp.eq.s32.totalorder %s34, 0
      %p124 = por %p122, %p123
      %s126 = sadd.s32 %s125, 1
      %p129 = scmp.eq.s32.totalorder %s28, 1
      %p130 = scmp.ne.s32.totalorder %s125, %s127
      %p131 = scmp.eq.s32.totalorder %s28, 0
      %p132 = por %p130, %p131
      %p133 = scmp.ne.s32.totalorder %s125, %s127
      %p134 = scmp.eq.s32.totalorder %s33, 1
      %p135 = por %p133, %p134
      %p136 = scmp.ne.s32.totalorder %s127, %s128
      %p137 = scmp.eq.s32.totalorder %s33, 0
      %p138 = por %p136, %p137
      %p139 = scmp.ne.s32.totalorder %s127, %s128
      %p140 = scmp.eq.s32.totalorder %s34, 1
      %p141 = por %p139, %p140
      %p143 = scmp.ne.s32.totalorder %s128, %s142
      %p144 = scmp.eq.s32.totalorder %s34, 0
      %p145 = por %p143, %p144
      %s147 = sadd.s32 %s146, 1
      %p150 = scmp.eq.s32.totalorder %s28, 1
      %p151 = scmp.ne.s32.totalorder %s146, %s148
      %p152 = scmp.eq.s32.totalorder %s28, 0
      %p153 = por %p151, %p152
      %p154 = scmp.ne.s32.totalorder %s146, %s148
      %p155 = scmp.eq.s32.totalorder %s33, 1
      %p156 = por %p154, %p155
      %p157 = scmp.ne.s32.totalorder %s148, %s149
      %p158 = scmp.eq.s32.totalorder %s33, 0
      %p159 = por %p157, %p158
      %p160 = scmp.ne.s32.totalorder %s148, %s149
      %p161 = scmp.eq.s32.totalorder %s34, 1
      %p162 = por %p160, %p161
      %p164 = scmp.ne.s32.totalorder %s149, %s163
      %p165 = scmp.eq.s32.totalorder %s34, 0
      %p166 = por %p164, %p165
      %s168 = sadd.s32 %s167, 1
      %p171 = scmp.eq.s32.totalorder %s28, 1
      %p172 = scmp.ne.s32.totalorder %s167, %s169
      %p173 = scmp.eq.s32.totalorder %s28, 0
      %p174 = por %p172, %p173
      %p175 = scmp.ne.s32.totalorder %s167, %s169
      %p176 = scmp.eq.s32.totalorder %s33, 1
      %p177 = por %p175, %p176
      %p178 = scmp.ne.s32.totalorder %s169, %s170
      %p179 = scmp.eq.s32.totalorder %s33, 0
      %p180 = por %p178, %p179
      %p181 = scmp.ne.s32.totalorder %s169, %s170
      %p182 = scmp.eq.s32.totalorder %s34, 1
      %p183 = por %p181, %p182
      %p185 = scmp.ne.s32.totalorder %s170, %s184
      %p186 = scmp.eq.s32.totalorder %s34, 0
      %p187 = por %p185, %p186
      %s189 = sadd.s32 %s188, 1
      %p192 = scmp.eq.s32.totalorder %s28, 1
      %p193 = scmp.ne.s32.totalorder %s188, %s190
      %p194 = scmp.eq.s32.totalorder %s28, 0
      %p195 = por %p193, %p194
      %p196 = scmp.ne.s32.totalorder %s188, %s190
      %p197 = scmp.eq.s32.totalorder %s33, 1
      %p198 = por %p196, %p197
      %p199 = scmp.ne.s32.totalorder %s190, %s191
      %p200 = scmp.eq.s32.totalorder %s33, 0
      %p201 = por %p199, %p200
      %p202 = scmp.ne.s32.totalorder %s190, %s191
      %p203 = scmp.eq.s32.totalorder %s34, 1
      %p204 = por %p202, %p203
      %p206 = scmp.ne.s32.totalorder %s191, %s205
      %p207 = scmp.eq.s32.totalorder %s34, 0
      %p208 = por %p206, %p207
      %s210 = sadd.s32 %s209, 1
      %p213 = scmp.eq.s32.totalorder %s28, 1
      %p214 = scmp.ne.s32.totalorder %s209, %s211
      %p215 = scmp.eq.s32.totalorder %s28, 0
      %p216 = por %p214, %p215
      %p217 = scmp.ne.s32.totalorder %s209, %s211
      %p218 = scmp.eq.s32.totalorder %s33, 1
      %p219 = por %p217, %p218
      %p220 = scmp.ne.s32.totalorder %s211, %s212
      %p221 = scmp.eq.s32.totalorder %s33, 0
      %p222 = por %p220, %p221
      %p223 = scmp.ne.s32.totalorder %s211, %s212
      %p224 = scmp.eq.s32.totalorder %s34, 1
      %p225 = por %p223, %p224
      %p227 = scmp.ne.s32.totalorder %s212, %s226
      %p228 = scmp.eq.s32.totalorder %s34, 0
      %p229 = por %p227, %p228
      %s231 = sadd.s32 %s230, 1
      %p234 = scmp.eq.s32.totalorder %s28, 1
      %p235 = scmp.ne.s32.totalorder %s230, %s232
      %p236 = scmp.eq.s32.totalorder %s28, 0
      %p237 = por %p235, %p236
      %p238 = scmp.ne.s32.totalorder %s230, %s232
      %p239 = scmp.eq.s32.totalorder %s33, 1
      %p240 = por %p238, %p239
      %p241 = scmp.ne.s32.totalorder %s232, %s233
      %p242 = scmp.eq.s32.totalorder %s33, 0
      %p243 = por %p241, %p242
      %p244 = scmp.ne.s32.totalorder %s232, %s233
      %p245 = scmp.eq.s32.totalorder %s34, 1
      %p246 = por %p244, %p245
      %p248 = scmp.ne.s32.totalorder %s233, %s247
      %p249 = scmp.eq.s32.totalorder %s34, 0
      %p250 = por %p248, %p249
      %s252 = sadd.s32 %s251, 1
      %p255 = scmp.eq.s32.totalorder %s28, 1
      %p256 = scmp.ne.s32.totalorder %s251, %s253
      %p257 = scmp.eq.s32.totalorder %s28, 0
      %p258 = por %p256, %p257
      %p259 = scmp.ne.s32.totalorder %s251, %s253
      %p260 = scmp.eq.s32.totalorder %s33, 1
      %p261 = por %p259, %p260
      %p262 = scmp.ne.s32.totalorder %s253, %s254
      %p263 = scmp.eq.s32.totalorder %s33, 0
      %p264 = por %p262, %p263
      %p265 = scmp.ne.s32.totalorder %s253, %s254
      %p266 = scmp.eq.s32.totalorder %s34, 1
      %p267 = por %p265, %p266
      %p269 = scmp.ne.s32.totalorder %s254, %s268
      %p270 = scmp.eq.s32.totalorder %s34, 0
      %p271 = por %p269, %p270
      %s273 = sadd.s32 %s272, 1
      %p276 = scmp.eq.s32.totalorder %s28, 1
      %p277 = scmp.ne.s32.totalorder %s272, %s274
      %p278 = scmp.eq.s32.totalorder %s28, 0
      %p279 = por %p277, %p278
      %p280 = scmp.ne.s32.totalorder %s272, %s274
      %p281 = scmp.eq.s32.totalorder %s33, 1
      %p282 = por %p280, %p281
      %p283 = scmp.ne.s32.totalorder %s274, %s275
      %p284 = scmp.eq.s32.totalorder %s33, 0
      %p285 = por %p283, %p284
      %p286 = scmp.ne.s32.totalorder %s274, %s275
      %p287 = scmp.eq.s32.totalorder %s34, 1
      %p288 = por %p286, %p287
      %p290 = scmp.ne.s32.totalorder %s275, %s289
      %p291 = scmp.eq.s32.totalorder %s34, 0
      %p292 = por %p290, %p291
      %s294 = sadd.s32 %s293, 1
      %p297 = scmp.eq.s32.totalorder %s28, 1
      %p298 = scmp.ne.s32.totalorder %s293, %s295
      %p299 = scmp.eq.s32.totalorder %s28, 0
      %p300 = por %p298, %p299
      %p301 = scmp.ne.s32.totalorder %s293, %s295
      %p302 = scmp.eq.s32.totalorder %s33, 1
      %p303 = por %p301, %p302
      %p304 = scmp.ne.s32.totalorder %s295, %s296
      %p305 = scmp.eq.s32.totalorder %s33, 0
      %p306 = por %p304, %p305
      %p307 = scmp.ne.s32.totalorder %s295, %s296
      %p308 = scmp.eq.s32.totalorder %s34, 1
      %p309 = por %p307, %p308
      %p311 = scmp.ne.s32.totalorder %s296, %s310
      %p312 = scmp.eq.s32.totalorder %s34, 0
      %p313 = por %p311, %p312
      %s314 = ssub.s32 %s28, %s35
      %p315 = scmp.eq.s32.totalorder %s314, 0
      %s317 = sadd.s32 %s316, 1
      %s318 = scalar_select %p315, %s316, %s317
      %p321 = pneg %p315
      %p322 = scmp.eq.s32.totalorder %s28, 1
      %p323 = por %p321, %p322
      %p324 = scmp.ne.s32.totalorder %s316, %s319
      %p325 = scmp.eq.s32.totalorder %s28, 0
      %p326 = por %p324, %p325
      %p327 = scmp.ne.s32.totalorder %s316, %s319
      %p328 = scmp.eq.s32.totalorder %s33, 1
      %p329 = por %p327, %p328
      %p330 = scmp.ne.s32.totalorder %s319, %s320
      %p331 = scmp.eq.s32.totalorder %s33, 0
      %p332 = por %p330, %p331
      %p333 = scmp.ne.s32.totalorder %s319, %s320
      %p334 = scmp.eq.s32.totalorder %s34, 1
      %p335 = por %p333, %p334
      %p337 = scmp.ne.s32.totalorder %s320, %s336
      %p338 = scmp.eq.s32.totalorder %s34, 0
      %p339 = por %p337, %p338
      %p340 = scmp.le.s32.totalorder 1, %s28
      %p341 = scmp.lt.s32.totalorder %s28, 3
      %p342 = pnand %p340, %p341
      %p343 = pneg %p342
      // Predicated region
      $region9: #{tpu_custom_call.1} parent=5 // pred_check
        _
      $region10: #{tpu_custom_call.1} parent=5 // pred_check_branch
        %345 = sbr.rel (%p342) target = $region12
      $region11: #{tpu_custom_call.1} parent=5 // pred_region
        %s346 = ssub.s32 %s28, 1
        // Predicated region
        $region13: #{tpu_custom_call.1} parent=11 // pred_check
          %p347 = pneg %p75
        $region14: #{tpu_custom_call.1} parent=11 // pred_check_branch
          %349 = sbr.rel (%p347) target = $region16
        $region15: #{tpu_custom_call.1} parent=11 // pred_region
          %s351 = ssub.s32 16, 16
          %352 = vsyncadd [#allocation6], %s351
          %s354 = sshll.u32 [#allocation5], 4
          %s355 = int_to_ptr.vmem [resolvable:$true] %s354
          %357 = dma.hbm_to_vmem [thread:$0]  %s1, 16, %s355, [#allocation6]
        $region16: #{tpu_custom_call.1} parent=11 // pred_fallthru
          _
        // Predicated region
        $region17: #{tpu_custom_call.1} parent=11 // pred_check
          %p358 = pneg %p96
        $region18: #{tpu_custom_call.1} parent=11 // pred_check_branch
          %360 = sbr.rel (%p358) target = $region20
        $region19: #{tpu_custom_call.1} parent=11 // pred_region
          %s362 = ssub.s32 16, 16
          %363 = vsyncadd [#allocation6], %s362
          %s365 = sshll.u32 [#allocation7], 4
          %s366 = int_to_ptr.vmem [resolvable:$true] %s365
          %368 = dma.hbm_to_vmem [thread:$0]  %s2, 16, %s366, [#allocation6]
        $region20: #{tpu_custom_call.1} parent=11 // pred_fallthru
          _
        // Predicated region
        $region21: #{tpu_custom_call.1} parent=11 // pred_check
          %p369 = pneg %p117
        $region22: #{tpu_custom_call.1} parent=11 // pred_check_branch
          %371 = sbr.rel (%p369) target = $region24
        $region23: #{tpu_custom_call.1} parent=11 // pred_region
          %s373 = ssub.s32 3072, 3072
          %374 = vsyncadd [#allocation9], %s373
          %s375 = sshll.u32 [#allocation8], 4
          %s376 = int_to_ptr.vmem [resolvable:$true] %s375
          %381 = dma.hbm_to_vmem [thread:$0]  %s3, 3072, %s376, [#allocation9], 192, 192, 12
        $region24: #{tpu_custom_call.1} parent=11 // pred_fallthru
          _
        // Predicated region
        $region25: #{tpu_custom_call.1} parent=11 // pred_check
          %p382 = pneg %p138
        $region26: #{tpu_custom_call.1} parent=11 // pred_check_branch
          %384 = sbr.rel (%p382) target = $region28
        $region27: #{tpu_custom_call.1} parent=11 // pred_region
          _
        $region28: #{tpu_custom_call.1} parent=11 // pred_fallthru
          _
        // Predicated region
        $region29: #{tpu_custom_call.1} parent=11 // pred_check
          %p385 = pneg %p159
        $region30: #{tpu_custom_call.1} parent=11 // pred_check_branch
          %387 = sbr.rel (%p385) target = $region32
        $region31: #{tpu_custom_call.1} parent=11 // pred_region
          %s389 = ssub.s32 1024, 1024
          %390 = vsyncadd [#allocation9], %s389
          %s391 = sshll.u32 [#allocation10], 4
          %s392 = int_to_ptr.vmem [resolvable:$true] %s391
          %397 = dma.hbm_to_vmem [thread:$0]  %s5, 1024, %s392, [#allocation9], 64, 64, 4
        $region32: #{tpu_custom_call.1} parent=11 // pred_fallthru
          _
        // Predicated region
        $region33: #{tpu_custom_call.1} parent=11 // pred_check
          %p398 = pneg %p180
        $region34: #{tpu_custom_call.1} parent=11 // pred_check_branch
          %400 = sbr.rel (%p398) target = $region36
        $region35: #{tpu_custom_call.1} parent=11 // pred_region
          _
        $region36: #{tpu_custom_call.1} parent=11 // pred_fallthru
          _
        // Predicated region
        $region37: #{tpu_custom_call.1} parent=11 // pred_check
          %p401 = pneg %p201
        $region38: #{tpu_custom_call.1} parent=11 // pred_check_branch
          %403 = sbr.rel (%p401) target = $region40
        $region39: #{tpu_custom_call.1} parent=11 // pred_region
          _
        $region40: #{tpu_custom_call.1} parent=11 // pred_fallthru
          _
        // Predicated region
        $region41: #{tpu_custom_call.1} parent=11 // pred_check
          %p404 = pneg %p222
        $region42: #{tpu_custom_call.1} parent=11 // pred_check_branch
          %406 = sbr.rel (%p404) target = $region44
        $region43: #{tpu_custom_call.1} parent=11 // pred_region
          _
        $region44: #{tpu_custom_call.1} parent=11 // pred_fallthru
          _
        // Predicated region
        $region45: #{tpu_custom_call.1} parent=11 // pred_check
          %p407 = pneg %p243
        $region46: #{tpu_custom_call.1} parent=11 // pred_check_branch
          %409 = sbr.rel (%p407) target = $region48
        $region47: #{tpu_custom_call.1} parent=11 // pred_region
          %s411 = ssub.s32 4096, 4096
          %412 = vsyncadd [#allocation12], %s411
          %s413 = sshll.u32 [#allocation11], 4
          %s414 = int_to_ptr.vmem [resolvable:$true] %s413
          %419 = dma.hbm_to_vmem [thread:$0]  %s9, 4096, %s414, [#allocation12], 256, 256, 16
        $region48: #{tpu_custom_call.1} parent=11 // pred_fallthru
          _
        // Predicated region
        $region49: #{tpu_custom_call.1} parent=11 // pred_check
          %p420 = pneg %p264
        $region50: #{tpu_custom_call.1} parent=11 // pred_check_branch
          %422 = sbr.rel (%p420) target = $region52
        $region51: #{tpu_custom_call.1} parent=11 // pred_region
          _
        $region52: #{tpu_custom_call.1} parent=11 // pred_fallthru
          _
        // Predicated region
        $region53: #{tpu_custom_call.1} parent=11 // pred_check
          %p423 = pneg %p285
        $region54: #{tpu_custom_call.1} parent=11 // pred_check_branch
          %425 = sbr.rel (%p423) target = $region56
        $region55: #{tpu_custom_call.1} parent=11 // pred_region
          %s427 = ssub.s32 4096, 4096
          %428 = vsyncadd [#allocation12], %s427
          %s429 = sshll.u32 [#allocation13], 4
          %s430 = int_to_ptr.vmem [resolvable:$true] %s429
          %435 = dma.hbm_to_vmem [thread:$0]  %s11, 4096, %s430, [#allocation12], 64, 64, 4
        $region56: #{tpu_custom_call.1} parent=11 // pred_fallthru
          _
        // Predicated region
        $region57: #{tpu_custom_call.1} parent=11 // pred_check
          %p436 = pneg %p306
        $region58: #{tpu_custom_call.1} parent=11 // pred_check_branch
          %438 = sbr.rel (%p436) target = $region60
        $region59: #{tpu_custom_call.1} parent=11 // pred_region
          _
        $region60: #{tpu_custom_call.1} parent=11 // pred_fallthru
          _
      $region12: #{tpu_custom_call.1} parent=5 // pred_fallthru
        _
      %p439 = scmp.lt.s32.totalorder %s28, 2
      // Predicated region
      $region61: #{tpu_custom_call.1} parent=5 // pred_check
        %p440 = pneg %p439
      $region62: #{tpu_custom_call.1} parent=5 // pred_check_branch
        %442 = sbr.rel (%p440) target = $region64
      $region63: #{tpu_custom_call.1} parent=5 // pred_region
        // Predicated region
        $region65: #{tpu_custom_call.1} parent=63 // pred_check
          %p443 = pneg %p48
        $region66: #{tpu_custom_call.1} parent=63 // pred_check_branch
          %445 = sbr.rel (%p443) target = $region68
        $region67: #{tpu_custom_call.1} parent=63 // pred_region
          %s446 = sand.u32 %s38, 1
          %s447 = scalar_lea.sflag [#allocation3], %s446
          %s448 = sand.u32 %s38, 1
          %s449 = smul.addr %s448, 8
          %s450 = scalar_lea.vmem [#allocation2], %s449
          %s452 = ssub.s32 128, 128
          %453 = vsyncadd %s447, %s452
          %s454 = smul.addr %s28, 128
          %s455 = scalar_lea.hbm %s0, %s454
          %s457 = sshll.u32 %s450, 4
          %s458 = int_to_ptr.vmem [resolvable:$true] %s457
          %460 = dma.hbm_to_vmem [thread:$0]  %s455, 128, %s458, %s447
        $region68: #{tpu_custom_call.1} parent=63 // pred_fallthru
          _
      $region64: #{tpu_custom_call.1} parent=5 // pred_fallthru
        _
      %p461 = scmp.le.s32.totalorder 1, %s28
      %p462 = scmp.lt.s32.totalorder %s28, 3
      %p463 = pnand %p461, %p462
      %p464 = pneg %p463
      // Predicated region
      $region69: #{tpu_custom_call.1} parent=5 // pred_check
        _
      $region70: #{tpu_custom_call.1} parent=5 // pred_check_branch
        %466 = sbr.rel (%p463) target = $region72
      $region71: #{tpu_custom_call.1} parent=5 // pred_region
        %s467 = ssub.s32 %s28, 1
        %s468 = sand.u32 %s41, 1
        %s469 = scalar_lea.sflag [#allocation3], %s468
        %s470 = sand.u32 %s41, 1
        %s471 = smul.addr %s470, 8
        %s472 = scalar_lea.vmem [#allocation2], %s471
        // Predicated region
        $region73: #{tpu_custom_call.1} parent=71 // pred_check
          %p473 = pneg %p54
        $region74: #{tpu_custom_call.1} parent=71 // pred_check_branch
          %475 = sbr.rel (%p473) target = $region76
        $region75: #{tpu_custom_call.1} parent=71 // pred_region
          %476 = dma.done %s469, 128
        $region76: #{tpu_custom_call.1} parent=71 // pred_fallthru
          _
        // Predicated region
        $region77: #{tpu_custom_call.1} parent=71 // pred_check
          %p477 = pneg %p75
        $region78: #{tpu_custom_call.1} parent=71 // pred_check_branch
          %479 = sbr.rel (%p477) target = $region80
        $region79: #{tpu_custom_call.1} parent=71 // pred_region
          %480 = dma.done [#allocation6], 16
        $region80: #{tpu_custom_call.1} parent=71 // pred_fallthru
          _
        // Predicated region
        $region81: #{tpu_custom_call.1} parent=71 // pred_check
          %p481 = pneg %p96
        $region82: #{tpu_custom_call.1} parent=71 // pred_check_branch
          %483 = sbr.rel (%p481) target = $region84
        $region83: #{tpu_custom_call.1} parent=71 // pred_region
          %484 = dma.done [#allocation6], 16
        $region84: #{tpu_custom_call.1} parent=71 // pred_fallthru
          _
        // Predicated region
        $region85: #{tpu_custom_call.1} parent=71 // pred_check
          %p485 = pneg %p117
        $region86: #{tpu_custom_call.1} parent=71 // pred_check_branch
          %487 = sbr.rel (%p485) target = $region88
        $region87: #{tpu_custom_call.1} parent=71 // pred_region
          %488 = dma.done [#allocation9], 3072
        $region88: #{tpu_custom_call.1} parent=71 // pred_fallthru
          _
        // Predicated region
        $region89: #{tpu_custom_call.1} parent=71 // pred_check
          %p489 = pneg %p159
        $region90: #{tpu_custom_call.1} parent=71 // pred_check_branch
          %491 = sbr.rel (%p489) target = $region92
        $region91: #{tpu_custom_call.1} parent=71 // pred_region
          %492 = dma.done [#allocation9], 1024
        $region92: #{tpu_custom_call.1} parent=71 // pred_fallthru
          _
        // Predicated region
        $region93: #{tpu_custom_call.1} parent=71 // pred_check
          %p493 = pneg %p243
        $region94: #{tpu_custom_call.1} parent=71 // pred_check_branch
          %495 = sbr.rel (%p493) target = $region96
        $region95: #{tpu_custom_call.1} parent=71 // pred_region
          %496 = dma.done [#allocation12], 4096
        $region96: #{tpu_custom_call.1} parent=71 // pred_fallthru
          _
        // Predicated region
        $region97: #{tpu_custom_call.1} parent=71 // pred_check
          %p497 = pneg %p285
        $region98: #{tpu_custom_call.1} parent=71 // pred_check_branch
          %499 = sbr.rel (%p497) target = $region100
        $region99: #{tpu_custom_call.1} parent=71 // pred_region
          %500 = dma.done [#allocation12], 4096
        $region100: #{tpu_custom_call.1} parent=71 // pred_fallthru
          _
        %s501 = sand.u32 %s41, 1
        %s502 = scalar_lea.sflag [#allocation3], %s501
        %s503 = sand.u32 %s41, 1
        %s504 = smul.addr %s503, 8
        %s505 = scalar_lea.vmem [#allocation2], %s504
        %p506 = pneg %p54
        %p507 = pneg %p51
        %p508 = pneg %p75
        %p509 = pneg %p72
        %p510 = pneg %p96
        %p511 = pneg %p93
        %p512 = pneg %p117
        %p513 = pneg %p114
        %p514 = pneg %p138
        %p515 = pneg %p135
        %p516 = pneg %p159
        %p517 = pneg %p156
        %p518 = pneg %p180
        %p519 = pneg %p177
        %p520 = pneg %p201
        %p521 = pneg %p198
        %p522 = pneg %p222
        %p523 = pneg %p219
        %p524 = pneg %p243
        %p525 = pneg %p240
        %p526 = pneg %p264
        %p527 = pneg %p261
        %p528 = pneg %p285
        %p529 = pneg %p282
        %p530 = pneg %p306
        %p531 = pneg %p303
        %p532 = pneg %p332
        %p533 = pneg %p329
        %s534 = sand.u32 %s319, 1
        %s535 = scalar_lea.sflag [#allocation4], %s534
        %s536 = sand.u32 %s319, 1
        %s537 = smul.addr %s536, 8
        %s538 = scalar_lea.vmem [#allocation14], %s537
        %v540 = vld [vmem:[%s472] sm:$0xff]
        %v541 = vld [vmem:[#allocation5] sm:$0x1]
        %v542 = vld [vmem:[#allocation7] sm:$0x1]
        %v543 = vrot.slane %v540, 4
        %v544 = vadd.f32 %v540, %v543
        %v545 = vrot.slane %v544, 2
        %v546 = vadd.f32 %v544, %v545
        %v547 = vrot.slane %v546, 1
        %v548 = vadd.f32 %v546, %v547
        %v549 = vrcp.pop 8.0
        %v550 = vmul.f32 %v548, %v549
        %v551 = vsub.f32 %v540, %v550
        %v552 = vmul.f32 %v551, %v551
        %v553 = vrot.slane %v552, 4
        %v554 = vadd.f32 %v552, %v553
        %v555 = vrot.slane %v554, 2
        %v556 = vadd.f32 %v554, %v555
        %v557 = vrot.slane %v556, 1
        %v558 = vadd.f32 %v556, %v557
        %v559 = vmul.f32 %v558, 0.14285715
        %v560 = vadd.f32 %v559, 1e-05
        %v561 = vrsqrt.pop %v560
        %v562 = vmul.f32 %v551, %v561
        %v564 = vlaneseq
        %v565 = vshrl.u32 %v564, 7
        %v566 = vsub.s32 0, %v565
        %v567 = vrot.slane %v541, %v566
        %v569 = vmul.f32 %v567, %v562
        %v571 = vlaneseq
        %v572 = vshrl.u32 %v571, 7
        %v573 = vsub.s32 0, %v572
        %v574 = vrot.slane %v542, %v573
        %v576 = vadd.f32 %v569, %v574
        %v577 = vpack.c.bf16 %v576, %v576
        %v578 = vld [vmem:[#allocation8] sm:$0xff]
        %v579 = vld [vmem:[#allocation8 + $0x8] sm:$0xf]
        %v580 = vld [vmem:[#allocation8 + $0xc] sm:$0xff]
        %v581 = vld [vmem:[#allocation8 + $0x14] sm:$0xf]
        %v582 = vld [vmem:[#allocation8 + $0x18] sm:$0xff]
        %v583 = vld [vmem:[#allocation8 + $0x20] sm:$0xf]
        %v584 = vld [vmem:[#allocation8 + $0x24] sm:$0xff]
        %v585 = vld [vmem:[#allocation8 + $0x2c] sm:$0xf]
        %v586 = vld [vmem:[#allocation8 + $0x30] sm:$0xff]
        %v587 = vld [vmem:[#allocation8 + $0x38] sm:$0xf]
        %v588 = vld [vmem:[#allocation8 + $0x3c] sm:$0xff]
        %v589 = vld [vmem:[#allocation8 + $0x44] sm:$0xf]
        %v590 = vld [vmem:[#allocation8 + $0x48] sm:$0xff]
        %v591 = vld [vmem:[#allocation8 + $0x50] sm:$0xf]
        %v592 = vld [vmem:[#allocation8 + $0x54] sm:$0xff]
        %v593 = vld [vmem:[#allocation8 + $0x5c] sm:$0xf]
        %v594 = vld [vmem:[#allocation8 + $0x60] sm:$0xff]
        %v595 = vld [vmem:[#allocation8 + $0x68] sm:$0xf]
        %v596 = vld [vmem:[#allocation8 + $0x6c] sm:$0xff]
        %v597 = vld [vmem:[#allocation8 + $0x74] sm:$0xf]
        %v598 = vld [vmem:[#allocation8 + $0x78] sm:$0xff]
        %v599 = vld [vmem:[#allocation8 + $0x80] sm:$0xf]
        %v600 = vld [vmem:[#allocation8 + $0x84] sm:$0xff]
        %v601 = vld [vmem:[#allocation8 + $0x8c] sm:$0xf]
        %v602 = vld [vmem:[#allocation8 + $0x90] sm:$0xff]
        %v603 = vld [vmem:[#allocation8 + $0x98] sm:$0xf]
        %v604 = vld [vmem:[#allocation8 + $0x9c] sm:$0xff]
        %v605 = vld [vmem:[#allocation8 + $0xa4] sm:$0xf]
        %v606 = vld [vmem:[#allocation8 + $0xa8] sm:$0xff]
        %v607 = vld [vmem:[#allocation8 + $0xb0] sm:$0xf]
        %v608 = vld [vmem:[#allocation8 + $0xb4] sm:$0xff]
        %v609 = vld [vmem:[#allocation8 + $0xbc] sm:$0xf]
        %v610 = vld [vmem:[%s4] sm:$0x7]
        %v612 = vlaneseq
        %v613 = vshrl.u32 %v612, 7
        %v614 = vsub.s32 0, %v613
        %v615 = vrot.slane %v610, %v614
        %v616 = vlaneseq
        %v617 = vshrl.u32 %v616, 7
        %v618 = vsub.s32 1, %v617
        %v619 = vrot.slane %v610, %v618
        %v620 = vlaneseq
        %v621 = vshrl.u32 %v620, 7
        %v622 = vsub.s32 2, %v621
        %v623 = vrot.slane %v610, %v622
        %v659 = vunpack.c.l.b16 %v578
        %v660 = vunpack.c.h.b16 %v578
        %v661 = vunpack.c.l.b16 %v579
        %v662 = vunpack.c.l.b16 %v580
        %v663 = vunpack.c.h.b16 %v580
        %v664 = vunpack.c.l.b16 %v581
        %v665 = vunpack.c.l.b16 %v582
        %v666 = vunpack.c.h.b16 %v582
        %v667 = vunpack.c.l.b16 %v583
        %v668 = vunpack.c.l.b16 %v584
        %v669 = vunpack.c.h.b16 %v584
        %v670 = vunpack.c.l.b16 %v585
        %v671 = vunpack.c.l.b16 %v586
        %v672 = vunpack.c.h.b16 %v586
        %v673 = vunpack.c.l.b16 %v587
        %v674 = vunpack.c.l.b16 %v588
        %v675 = vunpack.c.h.b16 %v588
        %v676 = vunpack.c.l.b16 %v589
        %v677 = vunpack.c.l.b16 %v590
        %v678 = vunpack.c.h.b16 %v590
        %v679 = vunpack.c.l.b16 %v591
        %v680 = vunpack.c.l.b16 %v592
        %v681 = vunpack.c.h.b16 %v592
        %v682 = vunpack.c.l.b16 %v593
        %v683 = vunpack.c.l.b16 %v594
        %v684 = vunpack.c.h.b16 %v594
        %v685 = vunpack.c.l.b16 %v595
        %v686 = vunpack.c.l.b16 %v596
        %v687 = vunpack.c.h.b16 %v596
        %v688 = vunpack.c.l.b16 %v597
        %v689 = vunpack.c.l.b16 %v598
        %v690 = vunpack.c.h.b16 %v598
        %v691 = vunpack.c.l.b16 %v599
        %v692 = vunpack.c.l.b16 %v600
        %v693 = vunpack.c.h.b16 %v600
        %v694 = vunpack.c.l.b16 %v601
        %v695 = vunpack.c.l.b16 %v602
        %v696 = vunpack.c.h.b16 %v602
        %v697 = vunpack.c.l.b16 %v603
        %v698 = vunpack.c.l.b16 %v604
        %v699 = vunpack.c.h.b16 %v604
        %v700 = vunpack.c.l.b16 %v605
        %v701 = vunpack.c.l.b16 %v606
        %v702 = vunpack.c.h.b16 %v606
        %v703 = vunpack.c.l.b16 %v607
        %v704 = vunpack.c.l.b16 %v608
        %v705 = vunpack.c.h.b16 %v608
        %v706 = vunpack.c.l.b16 %v609
        %v707 = vpack.c.b16 %v662, %v659
        %v708 = vpack.c.b16 %v663, %v660
        %v709 = vpack.c.b16 %v664, %v661
        %v710 = vpack.c.b16 %v668, %v665
        %v711 = vpack.c.b16 %v669, %v666
        %v712 = vpack.c.b16 %v670, %v667
        %v713 = vpack.c.b16 %v674, %v671
        %v714 = vpack.c.b16 %v675, %v672
        %v715 = vpack.c.b16 %v676, %v673
        %v716 = vpack.c.b16 %v680, %v677
        %v717 = vpack.c.b16 %v681, %v678
        %v718 = vpack.c.b16 %v682, %v679
        %v719 = vpack.c.b16 %v686, %v683
        %v720 = vpack.c.b16 %v687, %v684
        %v721 = vpack.c.b16 %v688, %v685
        %v722 = vpack.c.b16 %v692, %v689
        %v723 = vpack.c.b16 %v693, %v690
        %v724 = vpack.c.b16 %v694, %v691
        %v725 = vpack.c.b16 %v698, %v695
        %v726 = vpack.c.b16 %v699, %v696
        %v727 = vpack.c.b16 %v700, %v697
        %v728 = vpack.c.b16 %v704, %v701
        %v729 = vpack.c.b16 %v705, %v702
        %v730 = vpack.c.b16 %v706, %v703
        %755 = vmatprep.subr.bf16.mxu0 %v708
        %756 = vmatpush1.bf16.msra.mxu0 %v707
        %757 = vmatprep.subr.bf16.mxu0 %v711
        %758 = vmatpush1.bf16.msra.mxu0 %v710
        %759 = vmatprep.subr.bf16.mxu0 %v714
        %760 = vmatpush1.bf16.msra.mxu0 %v713
        %761 = vmatprep.subr.bf16.mxu0 %v717
        %762 = vmatpush1.bf16.msra.mxu0 %v716
        %763 = vmatprep.subr.bf16.mxu0 %v720
        %764 = vmatpush1.bf16.msra.mxu0 %v719
        %765 = vmatprep.subr.bf16.mxu0 %v723
        %766 = vmatpush1.bf16.msra.mxu0 %v722
        %767 = vmatprep.subr.bf16.mxu0 %v726
        %768 = vmatpush1.bf16.msra.mxu0 %v725
        %769 = vmatprep.subr.bf16.mxu0 %v729
        %770 = vmatpush1.bf16.msra.mxu0 %v728
        %771 = vmatprep.subr.bf16.mxu0 0
        %772 = vmatpush1.bf16.msra.mxu0 0
        %773 = vmatprep.subr.bf16.mxu0 0
        %774 = vmatpush1.bf16.msra.mxu0 0
        %775 = vmatprep.subr.bf16.mxu0 0
        %776 = vmatpush1.bf16.msra.mxu0 0
        %777 = vmatprep.subr.bf16.mxu0 0
        %778 = vmatpush1.bf16.msra.mxu0 0
        %779 = vmatprep.subr.bf16.mxu0 0
        %780 = vmatpush1.bf16.msra.mxu0 0
        %781 = vmatprep.subr.bf16.mxu0 0
        %782 = vmatpush1.bf16.msra.mxu0 0
        %783 = vmatprep.subr.bf16.mxu0 0
        %784 = vmatpush1.bf16.msra.mxu0 0
        %785 = vmatprep.subr.bf16.mxu0 0
        %786 = vmatpush1.bf16.msra.mxu0 0
        %787 = vmatprep.mubr.bf16.mxu0 0
        %788 = vmatmul.mubr.bf16.gmra.mrb[0].mxu0 %v577
        %v789 = vpop.f32.mrb[0].mxu0
        %v790 = vadd.f32 %v615, %v789
        %v791 = vpop.f32.mrb[0].mxu0
        %v792 = vadd.f32 %v619, %v791
        %v793 = vpop.f32.mrb[0].mxu0
        %v794 = vpop.f32.mrb[0].mxu0
        %795 = vdwg.mxu0
        %796 = vmatprep.subr.bf16.mxu0 0
        %797 = vmatpush1.bf16.msra.mxu0 %v709
        %798 = vmatprep.subr.bf16.mxu0 0
        %799 = vmatpush1.bf16.msra.mxu0 %v712
        %800 = vmatprep.subr.bf16.mxu0 0
        %801 = vmatpush1.bf16.msra.mxu0 %v715
        %802 = vmatprep.subr.bf16.mxu0 0
        %803 = vmatpush1.bf16.msra.mxu0 %v718
        %804 = vmatprep.subr.bf16.mxu0 0
        %805 = vmatpush1.bf16.msra.mxu0 %v721
        %806 = vmatprep.subr.bf16.mxu0 0
        %807 = vmatpush1.bf16.msra.mxu0 %v724
        %808 = vmatprep.subr.bf16.mxu0 0
        %809 = vmatpush1.bf16.msra.mxu0 %v727
        %810 = vmatprep.subr.bf16.mxu0 0
        %811 = vmatpush1.bf16.msra.mxu0 %v730
        %812 = vmatprep.subr.bf16.mxu0 0
        %813 = vmatpush1.bf16.msra.mxu0 0
        %814 = vmatprep.subr.bf16.mxu0 0
        %815 = vmatpush1.bf16.msra.mxu0 0
        %816 = vmatprep.subr.bf16.mxu0 0
        %817 = vmatpush1.bf16.msra.mxu0 0
        %818 = vmatprep.subr.bf16.mxu0 0
        %819 = vmatpush1.bf16.msra.mxu0 0
        %820 = vmatprep.subr.bf16.mxu0 0
        %821 = vmatpush1.bf16.msra.mxu0 0
        %822 = vmatprep.subr.bf16.mxu0 0
        %823 = vmatpush1.bf16.msra.mxu0 0
        %824 = vmatprep.subr.bf16.mxu0 0
        %825 = vmatpush1.bf16.msra.mxu0 0
        %826 = vmatprep.subr.bf16.mxu0 0
        %827 = vmatpush1.bf16.msra.mxu0 0
        %828 = vmatprep.mubr.bf16.mxu0 0
        %829 = vmatmul.mubr.bf16.gmra.mrb[0].mxu0 %v577
        %v830 = vpop.f32.mrb[0].mxu0
        %v831 = vadd.f32 %v623, %v830
        %v832 = vpop.f32.mrb[0].mxu0
        %v833 = vpop.f32.mrb[0].mxu0
        %v834 = vpop.f32.mrb[0].mxu0
        %835 = vdwg.mxu0
        %v836 = vpack.c.bf16 %v790, %v790
        %v837 = vmul.f32 %v792, 0.088388346
        %v838 = vpack.c.bf16 %v837, %v837
        %v839 = vpack.c.bf16 %v831, %v831
        %v840 = vlaneseq
        %v841 = vshrl.u32 %v840, 7
        %v842 = vlaneseq
        %v843 = vand.u32 %v842, 127
        %vm844 = vcmp.ge.s32.totalorder %v841, %v843
        %v845 = vld [vmem:[%s6] sm:$0x1]
        %v847 = vlaneseq
        %v848 = vshrl.u32 %v847, 7
        %v849 = vsub.s32 0, %v848
        %v850 = vrot.slane %v845, %v849
        %vm852 = vcmask 261120
        %v854 = vsel %vm852, %v838, 0
        %v857 = vsel %vm852, %v836, 0
        %859 = vmatprep.subr.bf16.mxu0 0
        %860 = vmatpush1.bf16.xpose.msra.mxu0 %v857
        %861 = vmatprep.subr.bf16.mxu0 0
        %862 = vmatpush1.bf16.xpose.msra.mxu0 0
        %863 = vmatprep.subr.bf16.mxu0 0
        %864 = vmatpush1.bf16.xpose.msra.mxu0 0
        %865 = vmatprep.subr.bf16.mxu0 0
        %866 = vmatpush1.bf16.xpose.msra.mxu0 0
        %867 = vmatprep.subr.bf16.mxu0 0
        %868 = vmatpush1.bf16.xpose.msra.mxu0 0
        %869 = vmatprep.subr.bf16.mxu0 0
        %870 = vmatpush1.bf16.xpose.msra.mxu0 0
        %871 = vmatprep.subr.bf16.mxu0 0
        %872 = vmatpush1.bf16.xpose.msra.mxu0 0
        %873 = vmatprep.subr.bf16.mxu0 0
        %874 = vmatpush1.bf16.xpose.msra.mxu0 0
        %875 = vmatprep.subr.bf16.mxu0 0
        %876 = vmatpush1.bf16.xpose.msra.mxu0 0
        %877 = vmatprep.subr.bf16.mxu0 0
        %878 = vmatpush1.bf16.xpose.msra.mxu0 0
        %879 = vmatprep.subr.bf16.mxu0 0
        %880 = vmatpush1.bf16.xpose.msra.mxu0 0
        %881 = vmatprep.subr.bf16.mxu0 0
        %882 = vmatpush1.bf16.xpose.msra.mxu0 0
        %883 = vmatprep.subr.bf16.mxu0 0
        %884 = vmatpush1.bf16.xpose.msra.mxu0 0
        %885 = vmatprep.subr.bf16.mxu0 0
        %886 = vmatpush1.bf16.xpose.msra.mxu0 0
        %887 = vmatprep.subr.bf16.mxu0 0
        %888 = vmatpush1.bf16.xpose.msra.mxu0 0
        %889 = vmatprep.subr.bf16.mxu0 0
        %890 = vmatpush1.bf16.xpose.msra.mxu0 0
        %891 = vmatprep.mubr.bf16.mxu0 0
        %892 = vmatmul.mubr.bf16.gmra.mrb[0].mxu0 %v854
        %v893 = vpop.f32.mrb[0].mxu0
        %v894 = vadd.f32 0.0, %v893
        %v895 = vpop.f32.mrb[0].mxu0
        %v896 = vpop.f32.mrb[0].mxu0
        %v897 = vpop.f32.mrb[0].mxu0
        %898 = vdwg.mxu0
        %v899 = vsel %vm844, %v894, -1e+30
        %vm900 = vcmask 64512
        %v901 = vsel %vm900, %v899, -inf
        %902 = vmax.xlane.f32.xlu0 %v901
        %v903 = vpop.xlane.xlu0 %902
        %v904 = vsub.f32 %v899, %v903
        %v905 = vmul.f32 %v904, 1.442695
        %v906 = vpow.pop %v905
        %v907 = vsel %vm900, %v906, 0.0
        %908 = vadd.xlane.f32.xlu0 %v907
        %v909 = vpop.xlane.xlu0 %908
        %v910 = vrcp.pop %v909
        %v911 = vmul.f32 %v906, %v910
        %v912 = vpack.c.bf16 %v911, %v911
        %v914 = vsel %vm900, %v912, 0
        %vm916 = vcmask 1043456
        %v918 = vsel %vm916, %v839, 0
        %920 = vmatprep.subr.bf16.mxu0 0
        %921 = vmatpush1.bf16.msra.mxu0 %v918
        %922 = vmatprep.subr.bf16.mxu0 0
        %923 = vmatpush1.bf16.msra.mxu0 0
        %924 = vmatprep.subr.bf16.mxu0 0
        %925 = vmatpush1.bf16.msra.mxu0 0
        %926 = vmatprep.subr.bf16.mxu0 0
        %927 = vmatpush1.bf16.msra.mxu0 0
        %928 = vmatprep.subr.bf16.mxu0 0
        %929 = vmatpush1.bf16.msra.mxu0 0
        %930 = vmatprep.subr.bf16.mxu0 0
        %931 = vmatpush1.bf16.msra.mxu0 0
        %932 = vmatprep.subr.bf16.mxu0 0
        %933 = vmatpush1.bf16.msra.mxu0 0
        %934 = vmatprep.subr.bf16.mxu0 0
        %935 = vmatpush1.bf16.msra.mxu0 0
        %936 = vmatprep.subr.bf16.mxu0 0
        %937 = vmatpush1.bf16.msra.mxu0 0
        %938 = vmatprep.subr.bf16.mxu0 0
        %939 = vmatpush1.bf16.msra.mxu0 0
        %940 = vmatprep.subr.bf16.mxu0 0
        %941 = vmatpush1.bf16.msra.mxu0 0
        %942 = vmatprep.subr.bf16.mxu0 0
        %943 = vmatpush1.bf16.msra.mxu0 0
        %944 = vmatprep.subr.bf16.mxu0 0
        %945 = vmatpush1.bf16.msra.mxu0 0
        %946 = vmatprep.subr.bf16.mxu0 0
        %947 = vmatpush1.bf16.msra.mxu0 0
        %948 = vmatprep.subr.bf16.mxu0 0
        %949 = vmatpush1.bf16.msra.mxu0 0
        %950 = vmatprep.subr.bf16.mxu0 0
        %951 = vmatpush1.bf16.msra.mxu0 0
        %952 = vmatprep.mubr.bf16.mxu0 0
        %953 = vmatmul.mubr.bf16.gmra.mrb[0].mxu0 %v914
        %v954 = vpop.f32.mrb[0].mxu0
        %v955 = vadd.f32 0.0, %v954
        %v956 = vpop.f32.mrb[0].mxu0
        %v957 = vpop.f32.mrb[0].mxu0
        %v958 = vpop.f32.mrb[0].mxu0
        %959 = vdwg.mxu0
        %v960 = vpack.c.bf16 %v955, %v955
        %v961 = vld [vmem:[#allocation10] sm:$0xf]
        %v962 = vld [vmem:[#allocation10 + $0x4] sm:$0xf]
        %v963 = vld [vmem:[#allocation10 + $0x8] sm:$0xf]
        %v964 = vld [vmem:[#allocation10 + $0xc] sm:$0xf]
        %v969 = vunpack.c.l.b16 %v961
        %v970 = vunpack.c.l.b16 %v962
        %v971 = vunpack.c.l.b16 %v963
        %v972 = vunpack.c.l.b16 %v964
        %v973 = vpack.c.b16 %v970, %v969
        %v974 = vpack.c.b16 %v972, %v971
        %v978 = vsel %vm852, %v960, 0
        %980 = vmatprep.subr.bf16.mxu0 0
        %981 = vmatpush1.bf16.msra.mxu0 %v973
        %982 = vmatprep.subr.bf16.mxu0 0
        %983 = vmatpush1.bf16.msra.mxu0 %v974
        %984 = vmatprep.subr.bf16.mxu0 0
        %985 = vmatpush1.bf16.msra.mxu0 0
        %986 = vmatprep.subr.bf16.mxu0 0
        %987 = vmatpush1.bf16.msra.mxu0 0
        %988 = vmatprep.subr.bf16.mxu0 0
        %989 = vmatpush1.bf16.msra.mxu0 0
        %990 = vmatprep.subr.bf16.mxu0 0
        %991 = vmatpush1.bf16.msra.mxu0 0
        %992 = vmatprep.subr.bf16.mxu0 0
        %993 = vmatpush1.bf16.msra.mxu0 0
        %994 = vmatprep.subr.bf16.mxu0 0
        %995 = vmatpush1.bf16.msra.mxu0 0
        %996 = vmatprep.subr.bf16.mxu0 0
        %997 = vmatpush1.bf16.msra.mxu0 0
        %998 = vmatprep.subr.bf16.mxu0 0
        %999 = vmatpush1.bf16.msra.mxu0 0
        %1000 = vmatprep.subr.bf16.mxu0 0
        %1001 = vmatpush1.bf16.msra.mxu0 0
        %1002 = vmatprep.subr.bf16.mxu0 0
        %1003 = vmatpush1.bf16.msra.mxu0 0
        %1004 = vmatprep.subr.bf16.mxu0 0
        %1005 = vmatpush1.bf16.msra.mxu0 0
        %1006 = vmatprep.subr.bf16.mxu0 0
        %1007 = vmatpush1.bf16.msra.mxu0 0
        %1008 = vmatprep.subr.bf16.mxu0 0
        %1009 = vmatpush1.bf16.msra.mxu0 0
        %1010 = vmatprep.subr.bf16.mxu0 0
        %1011 = vmatpush1.bf16.msra.mxu0 0
        %1012 = vmatprep.mubr.bf16.mxu0 0
        %1013 = vmatmul.mubr.bf16.gmra.mrb[0].mxu0 %v978
        %v1014 = vpop.f32.mrb[0].mxu0
        %v1015 = vadd.f32 0.0, %v1014
        %v1016 = vpop.f32.mrb[0].mxu0
        %v1017 = vpop.f32.mrb[0].mxu0
        %v1018 = vpop.f32.mrb[0].mxu0
        %1019 = vdwg.mxu0
        %v1020 = vadd.f32 %v850, %v1015
        %1022 = vrot.lane.b32.xlu0 %v838, 96
        %v1023 = vpop.permute.xlu0 %1022
        %1025 = vrot.lane.b32.xlu0 %v836, 96
        %v1026 = vpop.permute.xlu0 %1025
        %v1028 = vsel %vm852, %v1023, 0
        %v1031 = vsel %vm852, %v1026, 0
        %1033 = vmatprep.subr.bf16.mxu0 0
        %1034 = vmatpush1.bf16.xpose.msra.mxu0 %v1031
        %1035 = vmatprep.subr.bf16.mxu0 0
        %1036 = vmatpush1.bf16.xpose.msra.mxu0 0
        %1037 = vmatprep.subr.bf16.mxu0 0
        %1038 = vmatpush1.bf16.xpose.msra.mxu0 0
        %1039 = vmatprep.subr.bf16.mxu0 0
        %1040 = vmatpush1.bf16.xpose.msra.mxu0 0
        %1041 = vmatprep.subr.bf16.mxu0 0
        %1042 = vmatpush1.bf16.xpose.msra.mxu0 0
        %1043 = vmatprep.subr.bf16.mxu0 0
        %1044 = vmatpush1.bf16.xpose.msra.mxu0 0
        %1045 = vmatprep.subr.bf16.mxu0 0
        %1046 = vmatpush1.bf16.xpose.msra.mxu0 0
        %1047 = vmatprep.subr.bf16.mxu0 0
        %1048 = vmatpush1.bf16.xpose.msra.mxu0 0
        %1049 = vmatprep.subr.bf16.mxu0 0
        %1050 = vmatpush1.bf16.xpose.msra.mxu0 0
        %1051 = vmatprep.subr.bf16.mxu0 0
        %1052 = vmatpush1.bf16.xpose.msra.mxu0 0
        %1053 = vmatprep.subr.bf16.mxu0 0
        %1054 = vmatpush1.bf16.xpose.msra.mxu0 0
        %1055 = vmatprep.subr.bf16.mxu0 0
        %1056 = vmatpush1.bf16.xpose.msra.mxu0 0
        %1057 = vmatprep.subr.bf16.mxu0 0
        %1058 = vmatpush1.bf16.xpose.msra.mxu0 0
        %1059 = vmatprep.subr.bf16.mxu0 0
        %1060 = vmatpush1.bf16.xpose.msra.mxu0 0
        %1061 = vmatprep.subr.bf16.mxu0 0
        %1062 = vmatpush1.bf16.xpose.msra.mxu0 0
        %1063 = vmatprep.subr.bf16.mxu0 0
        %1064 = vmatpush1.bf16.xpose.msra.mxu0 0
        %1065 = vmatprep.mubr.bf16.mxu0 0
        %1066 = vmatmul.mubr.bf16.gmra.mrb[0].mxu0 %v1028
        %v1067 = vpop.f32.mrb[0].mxu0
        %v1068 = vadd.f32 0.0, %v1067
        %v1069 = vpop.f32.mrb[0].mxu0
        %v1070 = vpop.f32.mrb[0].mxu0
        %v1071 = vpop.f32.mrb[0].mxu0
        %1072 = vdwg.mxu0
        %v1073 = vsel %vm844, %v1068, -1e+30
        %v1074 = vsel %vm900, %v1073, -inf
        %1075 = vmax.xlane.f32.xlu0 %v1074
        %v1076 = vpop.xlane.xlu0 %1075
        %v1077 = vsub.f32 %v1073, %v1076
        %v1078 = vmul.f32 %v1077, 1.442695
        %v1079 = vpow.pop %v1078
        %v1080 = vsel %vm900, %v1079, 0.0
        %1081 = vadd.xlane.f32.xlu0 %v1080
        %v1082 = vpop.xlane.xlu0 %1081
        %v1083 = vrcp.pop %v1082
        %v1084 = vmul.f32 %v1079, %v1083
        %v1085 = vpack.c.bf16 %v1084, %v1084
        %1087 = vrot.lane.b32.xlu0 %v839, 96
        %v1088 = vpop.permute.xlu0 %1087
        %v1090 = vsel %vm900, %v1085, 0
        %v1093 = vsel %vm916, %v1088, 0
        %1095 = vmatprep.subr.bf16.mxu0 0
        %1096 = vmatpush1.bf16.msra.mxu0 %v1093
        %1097 = vmatprep.subr.bf16.mxu0 0
        %1098 = vmatpush1.bf16.msra.mxu0 0
        %1099 = vmatprep.subr.bf16.mxu0 0
        %1100 = vmatpush1.bf16.msra.mxu0 0
        %1101 = vmatprep.subr.bf16.mxu0 0
        %1102 = vmatpush1.bf16.msra.mxu0 0
        %1103 = vmatprep.subr.bf16.mxu0 0
        %1104 = vmatpush1.bf16.msra.mxu0 0
        %1105 = vmatprep.subr.bf16.mxu0 0
        %1106 = vmatpush1.bf16.msra.mxu0 0
        %1107 = vmatprep.subr.bf16.mxu0 0
        %1108 = vmatpush1.bf16.msra.mxu0 0
        %1109 = vmatprep.subr.bf16.mxu0 0
        %1110 = vmatpush1.bf16.msra.mxu0 0
        %1111 = vmatprep.subr.bf16.mxu0 0
        %1112 = vmatpush1.bf16.msra.mxu0 0
        %1113 = vmatprep.subr.bf16.mxu0 0
        %1114 = vmatpush1.bf16.msra.mxu0 0
        %1115 = vmatprep.subr.bf16.mxu0 0
        %1116 = vmatpush1.bf16.msra.mxu0 0
        %1117 = vmatprep.subr.bf16.mxu0 0
        %1118 = vmatpush1.bf16.msra.mxu0 0
        %1119 = vmatprep.subr.bf16.mxu0 0
        %1120 = vmatpush1.bf16.msra.mxu0 0
        %1121 = vmatprep.subr.bf16.mxu0 0
        %1122 = vmatpush1.bf16.msra.mxu0 0
        %1123 = vmatprep.subr.bf16.mxu0 0
        %1124 = vmatpush1.bf16.msra.mxu0 0
        %1125 = vmatprep.subr.bf16.mxu0 0
        %1126 = vmatpush1.bf16.msra.mxu0 0
        %1127 = vmatprep.mubr.bf16.mxu0 0
        %1128 = vmatmul.mubr.bf16.gmra.mrb[0].mxu0 %v1090
        %v1129 = vpop.f32.mrb[0].mxu0
        %v1130 = vadd.f32 0.0, %v1129
        %v1131 = vpop.f32.mrb[0].mxu0
        %v1132 = vpop.f32.mrb[0].mxu0
        %v1133 = vpop.f32.mrb[0].mxu0
        %1134 = vdwg.mxu0
        %v1135 = vpack.c.bf16 %v1130, %v1130
        %v1136 = vld [vmem:[#allocation10 + $0x10] sm:$0xf]
        %v1137 = vld [vmem:[#allocation10 + $0x14] sm:$0xf]
        %v1138 = vld [vmem:[#allocation10 + $0x18] sm:$0xf]
        %v1139 = vld [vmem:[#allocation10 + $0x1c] sm:$0xf]
        %v1144 = vunpack.c.l.b16 %v1136
        %v1145 = vunpack.c.l.b16 %v1137
        %v1146 = vunpack.c.l.b16 %v1138
        %v1147 = vunpack.c.l.b16 %v1139
        %v1148 = vpack.c.b16 %v1145, %v1144
        %v1149 = vpack.c.b16 %v1147, %v1146
        %v1153 = vsel %vm852, %v1135, 0
        %1155 = vmatprep.subr.bf16.mxu0 0
        %1156 = vmatpush1.bf16.msra.mxu0 %v1148
        %1157 = vmatprep.subr.bf16.mxu0 0
        %1158 = vmatpush1.bf16.msra.mxu0 %v1149
        %1159 = vmatprep.subr.bf16.mxu0 0
        %1160 = vmatpush1.bf16.msra.mxu0 0
        %1161 = vmatprep.subr.bf16.mxu0 0
        %1162 = vmatpush1.bf16.msra.mxu0 0
        %1163 = vmatprep.subr.bf16.mxu0 0
        %1164 = vmatpush1.bf16.msra.mxu0 0
        %1165 = vmatprep.subr.bf16.mxu0 0
        %1166 = vmatpush1.bf16.msra.mxu0 0
        %1167 = vmatprep.subr.bf16.mxu0 0
        %1168 = vmatpush1.bf16.msra.mxu0 0
        %1169 = vmatprep.subr.bf16.mxu0 0
        %1170 = vmatpush1.bf16.msra.mxu0 0
        %1171 = vmatprep.subr.bf16.mxu0 0
        %1172 = vmatpush1.bf16.msra.mxu0 0
        %1173 = vmatprep.subr.bf16.mxu0 0
        %1174 = vmatpush1.bf16.msra.mxu0 0
        %1175 = vmatprep.subr.bf16.mxu0 0
        %1176 = vmatpush1.bf16.msra.mxu0 0
        %1177 = vmatprep.subr.bf16.mxu0 0
        %1178 = vmatpush1.bf16.msra.mxu0 0
        %1179 = vmatprep.subr.bf16.mxu0 0
        %1180 = vmatpush1.bf16.msra.mxu0 0
        %1181 = vmatprep.subr.bf16.mxu0 0
        %1182 = vmatpush1.bf16.msra.mxu0 0
        %1183 = vmatprep.subr.bf16.mxu0 0
        %1184 = vmatpush1.bf16.msra.mxu0 0
        %1185 = vmatprep.subr.bf16.mxu0 0
        %1186 = vmatpush1.bf16.msra.mxu0 0
        %1187 = vmatprep.mubr.bf16.mxu0 0
        %1188 = vmatmul.mubr.bf16.gmra.mrb[0].mxu0 %v1153
        %v1189 = vpop.f32.mrb[0].mxu0
        %v1190 = vadd.f32 0.0, %v1189
        %v1191 = vpop.f32.mrb[0].mxu0
        %v1192 = vpop.f32.mrb[0].mxu0
        %v1193 = vpop.f32.mrb[0].mxu0
        %1194 = vdwg.mxu0
        %v1195 = vadd.f32 %v1020, %v1190
        %1196 = vrot.lane.b32.xlu0 %v838, 64
        %v1197 = vpop.permute.xlu0 %1196
        %1198 = vrot.lane.b32.xlu0 %v836, 64
        %v1199 = vpop.permute.xlu0 %1198
        %v1201 = vsel %vm852, %v1197, 0
        %v1204 = vsel %vm852, %v1199, 0
        %1206 = vmatprep.subr.bf16.mxu0 0
        %1207 = vmatpush1.bf16.xpose.msra.mxu0 %v1204
        %1208 = vmatprep.subr.bf16.mxu0 0
        %1209 = vmatpush1.bf16.xpose.msra.mxu0 0
        %1210 = vmatprep.subr.bf16.mxu0 0
        %1211 = vmatpush1.bf16.xpose.msra.mxu0 0
        %1212 = vmatprep.subr.bf16.mxu0 0
        %1213 = vmatpush1.bf16.xpose.msra.mxu0 0
        %1214 = vmatprep.subr.bf16.mxu0 0
        %1215 = vmatpush1.bf16.xpose.msra.mxu0 0
        %1216 = vmatprep.subr.bf16.mxu0 0
        %1217 = vmatpush1.bf16.xpose.msra.mxu0 0
        %1218 = vmatprep.subr.bf16.mxu0 0
        %1219 = vmatpush1.bf16.xpose.msra.mxu0 0
        %1220 = vmatprep.subr.bf16.mxu0 0
        %1221 = vmatpush1.bf16.xpose.msra.mxu0 0
        %1222 = vmatprep.subr.bf16.mxu0 0
        %1223 = vmatpush1.bf16.xpose.msra.mxu0 0
        %1224 = vmatprep.subr.bf16.mxu0 0
        %1225 = vmatpush1.bf16.xpose.msra.mxu0 0
        %1226 = vmatprep.subr.bf16.mxu0 0
        %1227 = vmatpush1.bf16.xpose.msra.mxu0 0
        %1228 = vmatprep.subr.bf16.mxu0 0
        %1229 = vmatpush1.bf16.xpose.msra.mxu0 0
        %1230 = vmatprep.subr.bf16.mxu0 0
        %1231 = vmatpush1.bf16.xpose.msra.mxu0 0
        %1232 = vmatprep.subr.bf16.mxu0 0
        %1233 = vmatpush1.bf16.xpose.msra.mxu0 0
        %1234 = vmatprep.subr.bf16.mxu0 0
        %1235 = vmatpush1.bf16.xpose.msra.mxu0 0
        %1236 = vmatprep.subr.bf16.mxu0 0
        %1237 = vmatpush1.bf16.xpose.msra.mxu0 0
        %1238 = vmatprep.mubr.bf16.mxu0 0
        %1239 = vmatmul.mubr.bf16.gmra.mrb[0].mxu0 %v1201
        %v1240 = vpop.f32.mrb[0].mxu0
        %v1241 = vadd.f32 0.0, %v1240
        %v1242 = vpop.f32.mrb[0].mxu0
        %v1243 = vpop.f32.mrb[0].mxu0
        %v1244 = vpop.f32.mrb[0].mxu0
        %1245 = vdwg.mxu0
        %v1246 = vsel %vm844, %v1241, -1e+30
        %v1247 = vsel %vm900, %v1246, -inf
        %1248 = vmax.xlane.f32.xlu0 %v1247
        %v1249 = vpop.xlane.xlu0 %1248
        %v1250 = vsub.f32 %v1246, %v1249
        %v1251 = vmul.f32 %v1250, 1.442695
        %v1252 = vpow.pop %v1251
        %v1253 = vsel %vm900, %v1252, 0.0
        %1254 = vadd.xlane.f32.xlu0 %v1253
        %v1255 = vpop.xlane.xlu0 %1254
        %v1256 = vrcp.pop %v1255
        %v1257 = vmul.f32 %v1252, %v1256
        %v1258 = vpack.c.bf16 %v1257, %v1257
        %1259 = vrot.lane.b32.xlu0 %v839, 64
        %v1260 = vpop.permute.xlu0 %1259
        %v1262 = vsel %vm900, %v1258, 0
        %v1265 = vsel %vm916, %v1260, 0
        %1267 = vmatprep.subr.bf16.mxu0 0
        %1268 = vmatpush1.bf16.msra.mxu0 %v1265
        %1269 = vmatprep.subr.bf16.mxu0 0
        %1270 = vmatpush1.bf16.msra.mxu0 0
        %1271 = vmatprep.subr.bf16.mxu0 0
        %1272 = vmatpush1.bf16.msra.mxu0 0
        %1273 = vmatprep.subr.bf16.mxu0 0
        %1274 = vmatpush1.bf16.msra.mxu0 0
        %1275 = vmatprep.subr.bf16.mxu0 0
        %1276 = vmatpush1.bf16.msra.mxu0 0
        %1277 = vmatprep.subr.bf16.mxu0 0
        %1278 = vmatpush1.bf16.msra.mxu0 0
        %1279 = vmatprep.subr.bf16.mxu0 0
        %1280 = vmatpush1.bf16.msra.mxu0 0
        %1281 = vmatprep.subr.bf16.mxu0 0
        %1282 = vmatpush1.bf16.msra.mxu0 0
        %1283 = vmatprep.subr.bf16.mxu0 0
        %1284 = vmatpush1.bf16.msra.mxu0 0
        %1285 = vmatprep.subr.bf16.mxu0 0
        %1286 = vmatpush1.bf16.msra.mxu0 0
        %1287 = vmatprep.subr.bf16.mxu0 0
        %1288 = vmatpush1.bf16.msra.mxu0 0
        %1289 = vmatprep.subr.bf16.mxu0 0
        %1290 = vmatpush1.bf16.msra.mxu0 0
        %1291 = vmatprep.subr.bf16.mxu0 0
        %1292 = vmatpush1.bf16.msra.mxu0 0
        %1293 = vmatprep.subr.bf16.mxu0 0
        %1294 = vmatpush1.bf16.msra.mxu0 0
        %1295 = vmatprep.subr.bf16.mxu0 0
        %1296 = vmatpush1.bf16.msra.mxu0 0
        %1297 = vmatprep.subr.bf16.mxu0 0
        %1298 = vmatpush1.bf16.msra.mxu0 0
        %1299 = vmatprep.mubr.bf16.mxu0 0
        %1300 = vmatmul.mubr.bf16.gmra.mrb[0].mxu0 %v1262
        %v1301 = vpop.f32.mrb[0].mxu0
        %v1302 = vadd.f32 0.0, %v1301
        %v1303 = vpop.f32.mrb[0].mxu0
        %v1304 = vpop.f32.mrb[0].mxu0
        %v1305 = vpop.f32.mrb[0].mxu0
        %1306 = vdwg.mxu0
        %v1307 = vpack.c.bf16 %v1302, %v1302
        %v1308 = vld [vmem:[#allocation10 + $0x20] sm:$0xf]
        %v1309 = vld [vmem:[#allocation10 + $0x24] sm:$0xf]
        %v1310 = vld [vmem:[#allocation10 + $0x28] sm:$0xf]
        %v1311 = vld [vmem:[#allocation10 + $0x2c] sm:$0xf]
        %v1316 = vunpack.c.l.b16 %v1308
        %v1317 = vunpack.c.l.b16 %v1309
        %v1318 = vunpack.c.l.b16 %v1310
        %v1319 = vunpack.c.l.b16 %v1311
        %v1320 = vpack.c.b16 %v1317, %v1316
        %v1321 = vpack.c.b16 %v1319, %v1318
        %v1325 = vsel %vm852, %v1307, 0
        %1327 = vmatprep.subr.bf16.mxu0 0
        %1328 = vmatpush1.bf16.msra.mxu0 %v1320
        %1329 = vmatprep.subr.bf16.mxu0 0
        %1330 = vmatpush1.bf16.msra.mxu0 %v1321
        %1331 = vmatprep.subr.bf16.mxu0 0
        %1332 = vmatpush1.bf16.msra.mxu0 0
        %1333 = vmatprep.subr.bf16.mxu0 0
        %1334 = vmatpush1.bf16.msra.mxu0 0
        %1335 = vmatprep.subr.bf16.mxu0 0
        %1336 = vmatpush1.bf16.msra.mxu0 0
        %1337 = vmatprep.subr.bf16.mxu0 0
        %1338 = vmatpush1.bf16.msra.mxu0 0
        %1339 = vmatprep.subr.bf16.mxu0 0
        %1340 = vmatpush1.bf16.msra.mxu0 0
        %1341 = vmatprep.subr.bf16.mxu0 0
        %1342 = vmatpush1.bf16.msra.mxu0 0
        %1343 = vmatprep.subr.bf16.mxu0 0
        %1344 = vmatpush1.bf16.msra.mxu0 0
        %1345 = vmatprep.subr.bf16.mxu0 0
        %1346 = vmatpush1.bf16.msra.mxu0 0
        %1347 = vmatprep.subr.bf16.mxu0 0
        %1348 = vmatpush1.bf16.msra.mxu0 0
        %1349 = vmatprep.subr.bf16.mxu0 0
        %1350 = vmatpush1.bf16.msra.mxu0 0
        %1351 = vmatprep.subr.bf16.mxu0 0
        %1352 = vmatpush1.bf16.msra.mxu0 0
        %1353 = vmatprep.subr.bf16.mxu0 0
        %1354 = vmatpush1.bf16.msra.mxu0 0
        %1355 = vmatprep.subr.bf16.mxu0 0
        %1356 = vmatpush1.bf16.msra.mxu0 0
        %1357 = vmatprep.subr.bf16.mxu0 0
        %1358 = vmatpush1.bf16.msra.mxu0 0
        %1359 = vmatprep.mubr.bf16.mxu0 0
        %1360 = vmatmul.mubr.bf16.gmra.mrb[0].mxu0 %v1325
        %v1361 = vpop.f32.mrb[0].mxu0
        %v1362 = vadd.f32 0.0, %v1361
        %v1363 = vpop.f32.mrb[0].mxu0
        %v1364 = vpop.f32.mrb[0].mxu0
        %v1365 = vpop.f32.mrb[0].mxu0
        %1366 = vdwg.mxu0
        %v1367 = vadd.f32 %v1195, %v1362
        %1368 = vrot.lane.b32.xlu0 %v838, 32
        %v1369 = vpop.permute.xlu0 %1368
        %1370 = vrot.lane.b32.xlu0 %v836, 32
        %v1371 = vpop.permute.xlu0 %1370
        %v1373 = vsel %vm852, %v1369, 0
        %v1376 = vsel %vm852, %v1371, 0
        %1378 = vmatprep.subr.bf16.mxu0 0
        %1379 = vmatpush1.bf16.xpose.msra.mxu0 %v1376
        %1380 = vmatprep.subr.bf16.mxu0 0
        %1381 = vmatpush1.bf16.xpose.msra.mxu0 0
        %1382 = vmatprep.subr.bf16.mxu0 0
        %1383 = vmatpush1.bf16.xpose.msra.mxu0 0
        %1384 = vmatprep.subr.bf16.mxu0 0
        %1385 = vmatpush1.bf16.xpose.msra.mxu0 0
        %1386 = vmatprep.subr.bf16.mxu0 0
        %1387 = vmatpush1.bf16.xpose.msra.mxu0 0
        %1388 = vmatprep.subr.bf16.mxu0 0
        %1389 = vmatpush1.bf16.xpose.msra.mxu0 0
        %1390 = vmatprep.subr.bf16.mxu0 0
        %1391 = vmatpush1.bf16.xpose.msra.mxu0 0
        %1392 = vmatprep.subr.bf16.mxu0 0
        %1393 = vmatpush1.bf16.xpose.msra.mxu0 0
        %1394 = vmatprep.subr.bf16.mxu0 0
        %1395 = vmatpush1.bf16.xpose.msra.mxu0 0
        %1396 = vmatprep.subr.bf16.mxu0 0
        %1397 = vmatpush1.bf16.xpose.msra.mxu0 0
        %1398 = vmatprep.subr.bf16.mxu0 0
        %1399 = vmatpush1.bf16.xpose.msra.mxu0 0
        %1400 = vmatprep.subr.bf16.mxu0 0
        %1401 = vmatpush1.bf16.xpose.msra.mxu0 0
        %1402 = vmatprep.subr.bf16.mxu0 0
        %1403 = vmatpush1.bf16.xpose.msra.mxu0 0
        %1404 = vmatprep.subr.bf16.mxu0 0
        %1405 = vmatpush1.bf16.xpose.msra.mxu0 0
        %1406 = vmatprep.subr.bf16.mxu0 0
        %1407 = vmatpush1.bf16.xpose.msra.mxu0 0
        %1408 = vmatprep.subr.bf16.mxu0 0
        %1409 = vmatpush1.bf16.xpose.msra.mxu0 0
        %1410 = vmatprep.mubr.bf16.mxu0 0
        %1411 = vmatmul.mubr.bf16.gmra.mrb[0].mxu0 %v1373
        %v1412 = vpop.f32.mrb[0].mxu0
        %v1413 = vadd.f32 0.0, %v1412
        %v1414 = vpop.f32.mrb[0].mxu0
        %v1415 = vpop.f32.mrb[0].mxu0
        %v1416 = vpop.f32.mrb[0].mxu0
        %1417 = vdwg.mxu0
        %v1418 = vsel %vm844, %v1413, -1e+30
        %v1419 = vsel %vm900, %v1418, -inf
        %1420 = vmax.xlane.f32.xlu0 %v1419
        %v1421 = vpop.xlane.xlu0 %1420
        %v1422 = vsub.f32 %v1418, %v1421
        %v1423 = vmul.f32 %v1422, 1.442695
        %v1424 = vpow.pop %v1423
        %v1425 = vsel %vm900, %v1424, 0.0
        %1426 = vadd.xlane.f32.xlu0 %v1425
        %v1427 = vpop.xlane.xlu0 %1426
        %v1428 = vrcp.pop %v1427
        %v1429 = vmul.f32 %v1424, %v1428
        %v1430 = vpack.c.bf16 %v1429, %v1429
        %1431 = vrot.lane.b32.xlu0 %v839, 32
        %v1432 = vpop.permute.xlu0 %1431
        %v1434 = vsel %vm900, %v1430, 0
        %v1437 = vsel %vm916, %v1432, 0
        %1439 = vmatprep.subr.bf16.mxu0 0
        %1440 = vmatpush1.bf16.msra.mxu0 %v1437
        %1441 = vmatprep.subr.bf16.mxu0 0
        %1442 = vmatpush1.bf16.msra.mxu0 0
        %1443 = vmatprep.subr.bf16.mxu0 0
        %1444 = vmatpush1.bf16.msra.mxu0 0
        %1445 = vmatprep.subr.bf16.mxu0 0
        %1446 = vmatpush1.bf16.msra.mxu0 0
        %1447 = vmatprep.subr.bf16.mxu0 0
        %1448 = vmatpush1.bf16.msra.mxu0 0
        %1449 = vmatprep.subr.bf16.mxu0 0
        %1450 = vmatpush1.bf16.msra.mxu0 0
        %1451 = vmatprep.subr.bf16.mxu0 0
        %1452 = vmatpush1.bf16.msra.mxu0 0
        %1453 = vmatprep.subr.bf16.mxu0 0
        %1454 = vmatpush1.bf16.msra.mxu0 0
        %1455 = vmatprep.subr.bf16.mxu0 0
        %1456 = vmatpush1.bf16.msra.mxu0 0
        %1457 = vmatprep.subr.bf16.mxu0 0
        %1458 = vmatpush1.bf16.msra.mxu0 0
        %1459 = vmatprep.subr.bf16.mxu0 0
        %1460 = vmatpush1.bf16.msra.mxu0 0
        %1461 = vmatprep.subr.bf16.mxu0 0
        %1462 = vmatpush1.bf16.msra.mxu0 0
        %1463 = vmatprep.subr.bf16.mxu0 0
        %1464 = vmatpush1.bf16.msra.mxu0 0
        %1465 = vmatprep.subr.bf16.mxu0 0
        %1466 = vmatpush1.bf16.msra.mxu0 0
        %1467 = vmatprep.subr.bf16.mxu0 0
        %1468 = vmatpush1.bf16.msra.mxu0 0
        %1469 = vmatprep.subr.bf16.mxu0 0
        %1470 = vmatpush1.bf16.msra.mxu0 0
        %1471 = vmatprep.mubr.bf16.mxu0 0
        %1472 = vmatmul.mubr.bf16.gmra.mrb[0].mxu0 %v1434
        %v1473 = vpop.f32.mrb[0].mxu0
        %v1474 = vadd.f32 0.0, %v1473
        %v1475 = vpop.f32.mrb[0].mxu0
        %v1476 = vpop.f32.mrb[0].mxu0
        %v1477 = vpop.f32.mrb[0].mxu0
        %1478 = vdwg.mxu0
        %v1479 = vpack.c.bf16 %v1474, %v1474
        %v1480 = vld [vmem:[#allocation10 + $0x30] sm:$0xf]
        %v1481 = vld [vmem:[#allocation10 + $0x34] sm:$0xf]
        %v1482 = vld [vmem:[#allocation10 + $0x38] sm:$0xf]
        %v1483 = vld [vmem:[#allocation10 + $0x3c] sm:$0xf]
        %v1488 = vunpack.c.l.b16 %v1480
        %v1489 = vunpack.c.l.b16 %v1481
        %v1490 = vunpack.c.l.b16 %v1482
        %v1491 = vunpack.c.l.b16 %v1483
        %v1492 = vpack.c.b16 %v1489, %v1488
        %v1493 = vpack.c.b16 %v1491, %v1490
        %v1497 = vsel %vm852, %v1479, 0
        %1499 = vmatprep.subr.bf16.mxu0 0
        %1500 = vmatpush1.bf16.msra.mxu0 %v1492
        %1501 = vmatprep.subr.bf16.mxu0 0
        %1502 = vmatpush1.bf16.msra.mxu0 %v1493
        %1503 = vmatprep.subr.bf16.mxu0 0
        %1504 = vmatpush1.bf16.msra.mxu0 0
        %1505 = vmatprep.subr.bf16.mxu0 0
        %1506 = vmatpush1.bf16.msra.mxu0 0
        %1507 = vmatprep.subr.bf16.mxu0 0
        %1508 = vmatpush1.bf16.msra.mxu0 0
        %1509 = vmatprep.subr.bf16.mxu0 0
        %1510 = vmatpush1.bf16.msra.mxu0 0
        %1511 = vmatprep.subr.bf16.mxu0 0
        %1512 = vmatpush1.bf16.msra.mxu0 0
        %1513 = vmatprep.subr.bf16.mxu0 0
        %1514 = vmatpush1.bf16.msra.mxu0 0
        %1515 = vmatprep.subr.bf16.mxu0 0
        %1516 = vmatpush1.bf16.msra.mxu0 0
        %1517 = vmatprep.subr.bf16.mxu0 0
        %1518 = vmatpush1.bf16.msra.mxu0 0
        %1519 = vmatprep.subr.bf16.mxu0 0
        %1520 = vmatpush1.bf16.msra.mxu0 0
        %1521 = vmatprep.subr.bf16.mxu0 0
        %1522 = vmatpush1.bf16.msra.mxu0 0
        %1523 = vmatprep.subr.bf16.mxu0 0
        %1524 = vmatpush1.bf16.msra.mxu0 0
        %1525 = vmatprep.subr.bf16.mxu0 0
        %1526 = vmatpush1.bf16.msra.mxu0 0
        %1527 = vmatprep.subr.bf16.mxu0 0
        %1528 = vmatpush1.bf16.msra.mxu0 0
        %1529 = vmatprep.subr.bf16.mxu0 0
        %1530 = vmatpush1.bf16.msra.mxu0 0
        %1531 = vmatprep.mubr.bf16.mxu0 0
        %1532 = vmatmul.mubr.bf16.gmra.mrb[0].mxu0 %v1497
        %v1533 = vpop.f32.mrb[0].mxu0
        %v1534 = vadd.f32 0.0, %v1533
        %v1535 = vpop.f32.mrb[0].mxu0
        %v1536 = vpop.f32.mrb[0].mxu0
        %v1537 = vpop.f32.mrb[0].mxu0
        %1538 = vdwg.mxu0
        %v1539 = vadd.f32 %v1367, %v1534
        %v1540 = vadd.f32 %v540, %v1539
        %v1541 = vld [vmem:[%s7] sm:$0x1]
        %v1542 = vld [vmem:[%s8] sm:$0x1]
        %v1543 = vrot.slane %v1540, 4
        %v1544 = vadd.f32 %v1540, %v1543
        %v1545 = vrot.slane %v1544, 2
        %v1546 = vadd.f32 %v1544, %v1545
        %v1547 = vrot.slane %v1546, 1
        %v1548 = vadd.f32 %v1546, %v1547
        %v1549 = vmul.f32 %v1548, %v549
        %v1550 = vsub.f32 %v1540, %v1549
        %v1551 = vmul.f32 %v1550, %v1550
        %v1552 = vrot.slane %v1551, 4
        %v1553 = vadd.f32 %v1551, %v1552
        %v1554 = vrot.slane %v1553, 2
        %v1555 = vadd.f32 %v1553, %v1554
        %v1556 = vrot.slane %v1555, 1
        %v1557 = vadd.f32 %v1555, %v1556
        %v1558 = vmul.f32 %v1557, 0.14285715
        %v1559 = vadd.f32 %v1558, 1e-05
        %v1560 = vrsqrt.pop %v1559
        %v1561 = vmul.f32 %v1550, %v1560
        %v1563 = vlaneseq
        %v1564 = vshrl.u32 %v1563, 7
        %v1565 = vsub.s32 0, %v1564
        %v1566 = vrot.slane %v1541, %v1565
        %v1568 = vmul.f32 %v1566, %v1561
        %v1570 = vlaneseq
        %v1571 = vshrl.u32 %v1570, 7
        %v1572 = vsub.s32 0, %v1571
        %v1573 = vrot.slane %v1542, %v1572
        %v1575 = vadd.f32 %v1568, %v1573
        %v1576 = vpack.c.bf16 %v1575, %v1575
        %v1577 = vld [vmem:[#allocation11] sm:$0xff]
        %v1578 = vld [vmem:[#allocation11 + $0x8] sm:$0xff]
        %v1579 = vld [vmem:[#allocation11 + $0x10] sm:$0xff]
        %v1580 = vld [vmem:[#allocation11 + $0x18] sm:$0xff]
        %v1581 = vld [vmem:[#allocation11 + $0x20] sm:$0xff]
        %v1582 = vld [vmem:[#allocation11 + $0x28] sm:$0xff]
        %v1583 = vld [vmem:[#allocation11 + $0x30] sm:$0xff]
        %v1584 = vld [vmem:[#allocation11 + $0x38] sm:$0xff]
        %v1585 = vld [vmem:[#allocation11 + $0x40] sm:$0xff]
        %v1586 = vld [vmem:[#allocation11 + $0x48] sm:$0xff]
        %v1587 = vld [vmem:[#allocation11 + $0x50] sm:$0xff]
        %v1588 = vld [vmem:[#allocation11 + $0x58] sm:$0xff]
        %v1589 = vld [vmem:[#allocation11 + $0x60] sm:$0xff]
        %v1590 = vld [vmem:[#allocation11 + $0x68] sm:$0xff]
        %v1591 = vld [vmem:[#allocation11 + $0x70] sm:$0xff]
        %v1592 = vld [vmem:[#allocation11 + $0x78] sm:$0xff]
        %v1593 = vld [vmem:[#allocation11 + $0x80] sm:$0xff]
        %v1594 = vld [vmem:[#allocation11 + $0x88] sm:$0xff]
        %v1595 = vld [vmem:[#allocation11 + $0x90] sm:$0xff]
        %v1596 = vld [vmem:[#allocation11 + $0x98] sm:$0xff]
        %v1597 = vld [vmem:[#allocation11 + $0xa0] sm:$0xff]
        %v1598 = vld [vmem:[#allocation11 + $0xa8] sm:$0xff]
        %v1599 = vld [vmem:[#allocation11 + $0xb0] sm:$0xff]
        %v1600 = vld [vmem:[#allocation11 + $0xb8] sm:$0xff]
        %v1601 = vld [vmem:[#allocation11 + $0xc0] sm:$0xff]
        %v1602 = vld [vmem:[#allocation11 + $0xc8] sm:$0xff]
        %v1603 = vld [vmem:[#allocation11 + $0xd0] sm:$0xff]
        %v1604 = vld [vmem:[#allocation11 + $0xd8] sm:$0xff]
        %v1605 = vld [vmem:[#allocation11 + $0xe0] sm:$0xff]
        %v1606 = vld [vmem:[#allocation11 + $0xe8] sm:$0xff]
        %v1607 = vld [vmem:[#allocation11 + $0xf0] sm:$0xff]
        %v1608 = vld [vmem:[#allocation11 + $0xf8] sm:$0xff]
        %v1609 = vld [vmem:[%s10] sm:$0xf]
        %v1611 = vlaneseq
        %v1612 = vshrl.u32 %v1611, 7
        %v1613 = vsub.s32 0, %v1612
        %v1614 = vrot.slane %v1609, %v1613
        %v1615 = vlaneseq
        %v1616 = vshrl.u32 %v1615, 7
        %v1617 = vsub.s32 1, %v1616
        %v1618 = vrot.slane %v1609, %v1617
        %v1619 = vlaneseq
        %v1620 = vshrl.u32 %v1619, 7
        %v1621 = vsub.s32 2, %v1620
        %v1622 = vrot.slane %v1609, %v1621
        %v1623 = vlaneseq
        %v1624 = vshrl.u32 %v1623, 7
        %v1625 = vsub.s32 3, %v1624
        %v1626 = vrot.slane %v1609, %v1625
        %v1663 = vunpack.c.l.b16 %v1577
        %v1664 = vunpack.c.h.b16 %v1577
        %v1665 = vunpack.c.l.b16 %v1578
        %v1666 = vunpack.c.h.b16 %v1578
        %v1667 = vunpack.c.l.b16 %v1579
        %v1668 = vunpack.c.h.b16 %v1579
        %v1669 = vunpack.c.l.b16 %v1580
        %v1670 = vunpack.c.h.b16 %v1580
        %v1671 = vunpack.c.l.b16 %v1581
        %v1672 = vunpack.c.h.b16 %v1581
        %v1673 = vunpack.c.l.b16 %v1582
        %v1674 = vunpack.c.h.b16 %v1582
        %v1675 = vunpack.c.l.b16 %v1583
        %v1676 = vunpack.c.h.b16 %v1583
        %v1677 = vunpack.c.l.b16 %v1584
        %v1678 = vunpack.c.h.b16 %v1584
        %v1679 = vunpack.c.l.b16 %v1585
        %v1680 = vunpack.c.h.b16 %v1585
        %v1681 = vunpack.c.l.b16 %v1586
        %v1682 = vunpack.c.h.b16 %v1586
        %v1683 = vunpack.c.l.b16 %v1587
        %v1684 = vunpack.c.h.b16 %v1587
        %v1685 = vunpack.c.l.b16 %v1588
        %v1686 = vunpack.c.h.b16 %v1588
        %v1687 = vunpack.c.l.b16 %v1589
        %v1688 = vunpack.c.h.b16 %v1589
        %v1689 = vunpack.c.l.b16 %v1590
        %v1690 = vunpack.c.h.b16 %v1590
        %v1691 = vunpack.c.l.b16 %v1591
        %v1692 = vunpack.c.h.b16 %v1591
        %v1693 = vunpack.c.l.b16 %v1592
        %v1694 = vunpack.c.h.b16 %v1592
        %v1695 = vunpack.c.l.b16 %v1593
        %v1696 = vunpack.c.h.b16 %v1593
        %v1697 = vunpack.c.l.b16 %v1594
        %v1698 = vunpack.c.h.b16 %v1594
        %v1699 = vunpack.c.l.b16 %v1595
        %v1700 = vunpack.c.h.b16 %v1595
        %v1701 = vunpack.c.l.b16 %v1596
        %v1702 = vunpack.c.h.b16 %v1596
        %v1703 = vunpack.c.l.b16 %v1597
        %v1704 = vunpack.c.h.b16 %v1597
        %v1705 = vunpack.c.l.b16 %v1598
        %v1706 = vunpack.c.h.b16 %v1598
        %v1707 = vunpack.c.l.b16 %v1599
        %v1708 = vunpack.c.h.b16 %v1599
        %v1709 = vunpack.c.l.b16 %v1600
        %v1710 = vunpack.c.h.b16 %v1600
        %v1711 = vunpack.c.l.b16 %v1601
        %v1712 = vunpack.c.h.b16 %v1601
        %v1713 = vunpack.c.l.b16 %v1602
        %v1714 = vunpack.c.h.b16 %v1602
        %v1715 = vunpack.c.l.b16 %v1603
        %v1716 = vunpack.c.h.b16 %v1603
        %v1717 = vunpack.c.l.b16 %v1604
        %v1718 = vunpack.c.h.b16 %v1604
        %v1719 = vunpack.c.l.b16 %v1605
        %v1720 = vunpack.c.h.b16 %v1605
        %v1721 = vunpack.c.l.b16 %v1606
        %v1722 = vunpack.c.h.b16 %v1606
        %v1723 = vunpack.c.l.b16 %v1607
        %v1724 = vunpack.c.h.b16 %v1607
        %v1725 = vunpack.c.l.b16 %v1608
        %v1726 = vunpack.c.h.b16 %v1608
        %v1727 = vpack.c.b16 %v1667, %v1663
        %v1728 = vpack.c.b16 %v1668, %v1664
        %v1729 = vpack.c.b16 %v1669, %v1665
        %v1730 = vpack.c.b16 %v1670, %v1666
        %v1731 = vpack.c.b16 %v1675, %v1671
        %v1732 = vpack.c.b16 %v1676, %v1672
        %v1733 = vpack.c.b16 %v1677, %v1673
        %v1734 = vpack.c.b16 %v1678, %v1674
        %v1735 = vpack.c.b16 %v1683, %v1679
        %v1736 = vpack.c.b16 %v1684, %v1680
        %v1737 = vpack.c.b16 %v1685, %v1681
        %v1738 = vpack.c.b16 %v1686, %v1682
        %v1739 = vpack.c.b16 %v1691, %v1687
        %v1740 = vpack.c.b16 %v1692, %v1688
        %v1741 = vpack.c.b16 %v1693, %v1689
        %v1742 = vpack.c.b16 %v1694, %v1690
        %v1743 = vpack.c.b16 %v1699, %v1695
        %v1744 = vpack.c.b16 %v1700, %v1696
        %v1745 = vpack.c.b16 %v1701, %v1697
        %v1746 = vpack.c.b16 %v1702, %v1698
        %v1747 = vpack.c.b16 %v1707, %v1703
        %v1748 = vpack.c.b16 %v1708, %v1704
        %v1749 = vpack.c.b16 %v1709, %v1705
        %v1750 = vpack.c.b16 %v1710, %v1706
        %v1751 = vpack.c.b16 %v1715, %v1711
        %v1752 = vpack.c.b16 %v1716, %v1712
        %v1753 = vpack.c.b16 %v1717, %v1713
        %v1754 = vpack.c.b16 %v1718, %v1714
        %v1755 = vpack.c.b16 %v1723, %v1719
        %v1756 = vpack.c.b16 %v1724, %v1720
        %v1757 = vpack.c.b16 %v1725, %v1721
        %v1758 = vpack.c.b16 %v1726, %v1722
        %1791 = vmatprep.subr.bf16.mxu0 %v1728
        %1792 = vmatpush1.bf16.msra.mxu0 %v1727
        %1793 = vmatprep.subr.bf16.mxu0 %v1732
        %1794 = vmatpush1.bf16.msra.mxu0 %v1731
        %1795 = vmatprep.subr.bf16.mxu0 %v1736
        %1796 = vmatpush1.bf16.msra.mxu0 %v1735
        %1797 = vmatprep.subr.bf16.mxu0 %v1740
        %1798 = vmatpush1.bf16.msra.mxu0 %v1739
        %1799 = vmatprep.subr.bf16.mxu0 %v1744
        %1800 = vmatpush1.bf16.msra.mxu0 %v1743
        %1801 = vmatprep.subr.bf16.mxu0 %v1748
        %1802 = vmatpush1.bf16.msra.mxu0 %v1747
        %1803 = vmatprep.subr.bf16.mxu0 %v1752
        %1804 = vmatpush1.bf16.msra.mxu0 %v1751
        %1805 = vmatprep.subr.bf16.mxu0 %v1756
        %1806 = vmatpush1.bf16.msra.mxu0 %v1755
        %1807 = vmatprep.subr.bf16.mxu0 0
        %1808 = vmatpush1.bf16.msra.mxu0 0
        %1809 = vmatprep.subr.bf16.mxu0 0
        %1810 = vmatpush1.bf16.msra.mxu0 0
        %1811 = vmatprep.subr.bf16.mxu0 0
        %1812 = vmatpush1.bf16.msra.mxu0 0
        %1813 = vmatprep.subr.bf16.mxu0 0
        %1814 = vmatpush1.bf16.msra.mxu0 0
        %1815 = vmatprep.subr.bf16.mxu0 0
        %1816 = vmatpush1.bf16.msra.mxu0 0
        %1817 = vmatprep.subr.bf16.mxu0 0
        %1818 = vmatpush1.bf16.msra.mxu0 0
        %1819 = vmatprep.subr.bf16.mxu0 0
        %1820 = vmatpush1.bf16.msra.mxu0 0
        %1821 = vmatprep.subr.bf16.mxu0 0
        %1822 = vmatpush1.bf16.msra.mxu0 0
        %1823 = vmatprep.mubr.bf16.mxu0 0
        %1824 = vmatmul.mubr.bf16.gmra.mrb[0].mxu0 %v1576
        %v1825 = vpop.f32.mrb[0].mxu0
        %v1826 = vadd.f32 %v1614, %v1825
        %v1827 = vpop.f32.mrb[0].mxu0
        %v1828 = vadd.f32 %v1618, %v1827
        %v1829 = vpop.f32.mrb[0].mxu0
        %v1830 = vpop.f32.mrb[0].mxu0
        %1831 = vdwg.mxu0
        %1832 = vmatprep.subr.bf16.mxu0 %v1730
        %1833 = vmatpush1.bf16.msra.mxu0 %v1729
        %1834 = vmatprep.subr.bf16.mxu0 %v1734
        %1835 = vmatpush1.bf16.msra.mxu0 %v1733
        %1836 = vmatprep.subr.bf16.mxu0 %v1738
        %1837 = vmatpush1.bf16.msra.mxu0 %v1737
        %1838 = vmatprep.subr.bf16.mxu0 %v1742
        %1839 = vmatpush1.bf16.msra.mxu0 %v1741
        %1840 = vmatprep.subr.bf16.mxu0 %v1746
        %1841 = vmatpush1.bf16.msra.mxu0 %v1745
        %1842 = vmatprep.subr.bf16.mxu0 %v1750
        %1843 = vmatpush1.bf16.msra.mxu0 %v1749
        %1844 = vmatprep.subr.bf16.mxu0 %v1754
        %1845 = vmatpush1.bf16.msra.mxu0 %v1753
        %1846 = vmatprep.subr.bf16.mxu0 %v1758
        %1847 = vmatpush1.bf16.msra.mxu0 %v1757
        %1848 = vmatprep.subr.bf16.mxu0 0
        %1849 = vmatpush1.bf16.msra.mxu0 0
        %1850 = vmatprep.subr.bf16.mxu0 0
        %1851 = vmatpush1.bf16.msra.mxu0 0
        %1852 = vmatprep.subr.bf16.mxu0 0
        %1853 = vmatpush1.bf16.msra.mxu0 0
        %1854 = vmatprep.subr.bf16.mxu0 0
        %1855 = vmatpush1.bf16.msra.mxu0 0
        %1856 = vmatprep.subr.bf16.mxu0 0
        %1857 = vmatpush1.bf16.msra.mxu0 0
        %1858 = vmatprep.subr.bf16.mxu0 0
        %1859 = vmatpush1.bf16.msra.mxu0 0
        %1860 = vmatprep.subr.bf16.mxu0 0
        %1861 = vmatpush1.bf16.msra.mxu0 0
        %1862 = vmatprep.subr.bf16.mxu0 0
        %1863 = vmatpush1.bf16.msra.mxu0 0
        %1864 = vmatprep.mubr.bf16.mxu0 0
        %1865 = vmatmul.mubr.bf16.gmra.mrb[0].mxu0 %v1576
        %v1866 = vpop.f32.mrb[0].mxu0
        %v1867 = vadd.f32 %v1622, %v1866
        %v1868 = vpop.f32.mrb[0].mxu0
        %v1869 = vadd.f32 %v1626, %v1868
        %v1870 = vpop.f32.mrb[0].mxu0
        %v1871 = vpop.f32.mrb[0].mxu0
        %1872 = vdwg.mxu0
        %v1873 = vmax.f32 %v1826, 0.0
        %v1874 = vmax.f32 %v1828, 0.0
        %v1875 = vmax.f32 %v1867, 0.0
        %v1876 = vmax.f32 %v1869, 0.0
        %v1877 = vpack.c.bf16 %v1873, %v1873
        %v1878 = vpack.c.bf16 %v1874, %v1874
        %v1879 = vpack.c.bf16 %v1875, %v1875
        %v1880 = vpack.c.bf16 %v1876, %v1876
        %v1881 = vld [vmem:[#allocation13] sm:$0xf]
        %v1882 = vld [vmem:[#allocation13 + $0x4] sm:$0xf]
        %v1883 = vld [vmem:[#allocation13 + $0x8] sm:$0xf]
        %v1884 = vld [vmem:[#allocation13 + $0xc] sm:$0xf]
        %v1885 = vld [vmem:[#allocation13 + $0x10] sm:$0xf]
        %v1886 = vld [vmem:[#allocation13 + $0x14] sm:$0xf]
        %v1887 = vld [vmem:[#allocation13 + $0x18] sm:$0xf]
        %v1888 = vld [vmem:[#allocation13 + $0x1c] sm:$0xf]
        %v1889 = vld [vmem:[#allocation13 + $0x20] sm:$0xf]
        %v1890 = vld [vmem:[#allocation13 + $0x24] sm:$0xf]
        %v1891 = vld [vmem:[#allocation13 + $0x28] sm:$0xf]
        %v1892 = vld [vmem:[#allocation13 + $0x2c] sm:$0xf]
        %v1893 = vld [vmem:[#allocation13 + $0x30] sm:$0xf]
        %v1894 = vld [vmem:[#allocation13 + $0x34] sm:$0xf]
        %v1895 = vld [vmem:[#allocation13 + $0x38] sm:$0xf]
        %v1896 = vld [vmem:[#allocation13 + $0x3c] sm:$0xf]
        %v1897 = vld [vmem:[#allocation13 + $0x40] sm:$0xf]
        %v1898 = vld [vmem:[#allocation13 + $0x44] sm:$0xf]
        %v1899 = vld [vmem:[#allocation13 + $0x48] sm:$0xf]
        %v1900 = vld [vmem:[#allocation13 + $0x4c] sm:$0xf]
        %v1901 = vld [vmem:[#allocation13 + $0x50] sm:$0xf]
        %v1902 = vld [vmem:[#allocation13 + $0x54] sm:$0xf]
        %v1903 = vld [vmem:[#allocation13 + $0x58] sm:$0xf]
        %v1904 = vld [vmem:[#allocation13 + $0x5c] sm:$0xf]
        %v1905 = vld [vmem:[#allocation13 + $0x60] sm:$0xf]
        %v1906 = vld [vmem:[#allocation13 + $0x64] sm:$0xf]
        %v1907 = vld [vmem:[#allocation13 + $0x68] sm:$0xf]
        %v1908 = vld [vmem:[#allocation13 + $0x6c] sm:$0xf]
        %v1909 = vld [vmem:[#allocation13 + $0x70] sm:$0xf]
        %v1910 = vld [vmem:[#allocation13 + $0x74] sm:$0xf]
        %v1911 = vld [vmem:[#allocation13 + $0x78] sm:$0xf]
        %v1912 = vld [vmem:[#allocation13 + $0x7c] sm:$0xf]
        %v1913 = vld [vmem:[#allocation13 + $0x80] sm:$0xf]
        %v1914 = vld [vmem:[#allocation13 + $0x84] sm:$0xf]
        %v1915 = vld [vmem:[#allocation13 + $0x88] sm:$0xf]
        %v1916 = vld [vmem:[#allocation13 + $0x8c] sm:$0xf]
        %v1917 = vld [vmem:[#allocation13 + $0x90] sm:$0xf]
        %v1918 = vld [vmem:[#allocation13 + $0x94] sm:$0xf]
        %v1919 = vld [vmem:[#allocation13 + $0x98] sm:$0xf]
        %v1920 = vld [vmem:[#allocation13 + $0x9c] sm:$0xf]
        %v1921 = vld [vmem:[#allocation13 + $0xa0] sm:$0xf]
        %v1922 = vld [vmem:[#allocation13 + $0xa4] sm:$0xf]
        %v1923 = vld [vmem:[#allocation13 + $0xa8] sm:$0xf]
        %v1924 = vld [vmem:[#allocation13 + $0xac] sm:$0xf]
        %v1925 = vld [vmem:[#allocation13 + $0xb0] sm:$0xf]
        %v1926 = vld [vmem:[#allocation13 + $0xb4] sm:$0xf]
        %v1927 = vld [vmem:[#allocation13 + $0xb8] sm:$0xf]
        %v1928 = vld [vmem:[#allocation13 + $0xbc] sm:$0xf]
        %v1929 = vld [vmem:[#allocation13 + $0xc0] sm:$0xf]
        %v1930 = vld [vmem:[#allocation13 + $0xc4] sm:$0xf]
        %v1931 = vld [vmem:[#allocation13 + $0xc8] sm:$0xf]
        %v1932 = vld [vmem:[#allocation13 + $0xcc] sm:$0xf]
        %v1933 = vld [vmem:[#allocation13 + $0xd0] sm:$0xf]
        %v1934 = vld [vmem:[#allocation13 + $0xd4] sm:$0xf]
        %v1935 = vld [vmem:[#allocation13 + $0xd8] sm:$0xf]
        %v1936 = vld [vmem:[#allocation13 + $0xdc] sm:$0xf]
        %v1937 = vld [vmem:[#allocation13 + $0xe0] sm:$0xf]
        %v1938 = vld [vmem:[#allocation13 + $0xe4] sm:$0xf]
        %v1939 = vld [vmem:[#allocation13 + $0xe8] sm:$0xf]
        %v1940 = vld [vmem:[#allocation13 + $0xec] sm:$0xf]
        %v1941 = vld [vmem:[#allocation13 + $0xf0] sm:$0xf]
        %v1942 = vld [vmem:[#allocation13 + $0xf4] sm:$0xf]
        %v1943 = vld [vmem:[#allocation13 + $0xf8] sm:$0xf]
        %v1944 = vld [vmem:[#allocation13 + $0xfc] sm:$0xf]
        %v1945 = vld [vmem:[%s12] sm:$0x1]
        %v1947 = vlaneseq
        %v1948 = vshrl.u32 %v1947, 7
        %v1949 = vsub.s32 0, %v1948
        %v1950 = vrot.slane %v1945, %v1949
        %v2016 = vunpack.c.l.b16 %v1881
        %v2017 = vunpack.c.l.b16 %v1882
        %v2018 = vunpack.c.l.b16 %v1883
        %v2019 = vunpack.c.l.b16 %v1884
        %v2020 = vunpack.c.l.b16 %v1885
        %v2021 = vunpack.c.l.b16 %v1886
        %v2022 = vunpack.c.l.b16 %v1887
        %v2023 = vunpack.c.l.b16 %v1888
        %v2024 = vunpack.c.l.b16 %v1889
        %v2025 = vunpack.c.l.b16 %v1890
        %v2026 = vunpack.c.l.b16 %v1891
        %v2027 = vunpack.c.l.b16 %v1892
        %v2028 = vunpack.c.l.b16 %v1893
        %v2029 = vunpack.c.l.b16 %v1894
        %v2030 = vunpack.c.l.b16 %v1895
        %v2031 = vunpack.c.l.b16 %v1896
        %v2032 = vunpack.c.l.b16 %v1897
        %v2033 = vunpack.c.l.b16 %v1898
        %v2034 = vunpack.c.l.b16 %v1899
        %v2035 = vunpack.c.l.b16 %v1900
        %v2036 = vunpack.c.l.b16 %v1901
        %v2037 = vunpack.c.l.b16 %v1902
        %v2038 = vunpack.c.l.b16 %v1903
        %v2039 = vunpack.c.l.b16 %v1904
        %v2040 = vunpack.c.l.b16 %v1905
        %v2041 = vunpack.c.l.b16 %v1906
        %v2042 = vunpack.c.l.b16 %v1907
        %v2043 = vunpack.c.l.b16 %v1908
        %v2044 = vunpack.c.l.b16 %v1909
        %v2045 = vunpack.c.l.b16 %v1910
        %v2046 = vunpack.c.l.b16 %v1911
        %v2047 = vunpack.c.l.b16 %v1912
        %v2048 = vunpack.c.l.b16 %v1913
        %v2049 = vunpack.c.l.b16 %v1914
        %v2050 = vunpack.c.l.b16 %v1915
        %v2051 = vunpack.c.l.b16 %v1916
        %v2052 = vunpack.c.l.b16 %v1917
        %v2053 = vunpack.c.l.b16 %v1918
        %v2054 = vunpack.c.l.b16 %v1919
        %v2055 = vunpack.c.l.b16 %v1920
        %v2056 = vunpack.c.l.b16 %v1921
        %v2057 = vunpack.c.l.b16 %v1922
        %v2058 = vunpack.c.l.b16 %v1923
        %v2059 = vunpack.c.l.b16 %v1924
        %v2060 = vunpack.c.l.b16 %v1925
        %v2061 = vunpack.c.l.b16 %v1926
        %v2062 = vunpack.c.l.b16 %v1927
        %v2063 = vunpack.c.l.b16 %v1928
        %v2064 = vunpack.c.l.b16 %v1929
        %v2065 = vunpack.c.l.b16 %v1930
        %v2066 = vunpack.c.l.b16 %v1931
        %v2067 = vunpack.c.l.b16 %v1932
        %v2068 = vunpack.c.l.b16 %v1933
        %v2069 = vunpack.c.l.b16 %v1934
        %v2070 = vunpack.c.l.b16 %v1935
        %v2071 = vunpack.c.l.b16 %v1936
        %v2072 = vunpack.c.l.b16 %v1937
        %v2073 = vunpack.c.l.b16 %v1938
        %v2074 = vunpack.c.l.b16 %v1939
        %v2075 = vunpack.c.l.b16 %v1940
        %v2076 = vunpack.c.l.b16 %v1941
        %v2077 = vunpack.c.l.b16 %v1942
        %v2078 = vunpack.c.l.b16 %v1943
        %v2079 = vunpack.c.l.b16 %v1944
        %v2080 = vpack.c.b16 %v2017, %v2016
        %v2081 = vpack.c.b16 %v2019, %v2018
        %v2082 = vpack.c.b16 %v2021, %v2020
        %v2083 = vpack.c.b16 %v2023, %v2022
        %v2084 = vpack.c.b16 %v2025, %v2024
        %v2085 = vpack.c.b16 %v2027, %v2026
        %v2086 = vpack.c.b16 %v2029, %v2028
        %v2087 = vpack.c.b16 %v2031, %v2030
        %v2088 = vpack.c.b16 %v2033, %v2032
        %v2089 = vpack.c.b16 %v2035, %v2034
        %v2090 = vpack.c.b16 %v2037, %v2036
        %v2091 = vpack.c.b16 %v2039, %v2038
        %v2092 = vpack.c.b16 %v2041, %v2040
        %v2093 = vpack.c.b16 %v2043, %v2042
        %v2094 = vpack.c.b16 %v2045, %v2044
        %v2095 = vpack.c.b16 %v2047, %v2046
        %v2096 = vpack.c.b16 %v2049, %v2048
        %v2097 = vpack.c.b16 %v2051, %v2050
        %v2098 = vpack.c.b16 %v2053, %v2052
        %v2099 = vpack.c.b16 %v2055, %v2054
        %v2100 = vpack.c.b16 %v2057, %v2056
        %v2101 = vpack.c.b16 %v2059, %v2058
        %v2102 = vpack.c.b16 %v2061, %v2060
        %v2103 = vpack.c.b16 %v2063, %v2062
        %v2104 = vpack.c.b16 %v2065, %v2064
        %v2105 = vpack.c.b16 %v2067, %v2066
        %v2106 = vpack.c.b16 %v2069, %v2068
        %v2107 = vpack.c.b16 %v2071, %v2070
        %v2108 = vpack.c.b16 %v2073, %v2072
        %v2109 = vpack.c.b16 %v2075, %v2074
        %v2110 = vpack.c.b16 %v2077, %v2076
        %v2111 = vpack.c.b16 %v2079, %v2078
        %2144 = vmatprep.subr.bf16.mxu0 0
        %2145 = vmatpush1.bf16.msra.mxu0 %v2080
        %2146 = vmatprep.subr.bf16.mxu0 0
        %2147 = vmatpush1.bf16.msra.mxu0 %v2081
        %2148 = vmatprep.subr.bf16.mxu0 0
        %2149 = vmatpush1.bf16.msra.mxu0 %v2082
        %2150 = vmatprep.subr.bf16.mxu0 0
        %2151 = vmatpush1.bf16.msra.mxu0 %v2083
        %2152 = vmatprep.subr.bf16.mxu0 0
        %2153 = vmatpush1.bf16.msra.mxu0 %v2084
        %2154 = vmatprep.subr.bf16.mxu0 0
        %2155 = vmatpush1.bf16.msra.mxu0 %v2085
        %2156 = vmatprep.subr.bf16.mxu0 0
        %2157 = vmatpush1.bf16.msra.mxu0 %v2086
        %2158 = vmatprep.subr.bf16.mxu0 0
        %2159 = vmatpush1.bf16.msra.mxu0 %v2087
        %2160 = vmatprep.subr.bf16.mxu0 0
        %2161 = vmatpush1.bf16.msra.mxu0 %v2088
        %2162 = vmatprep.subr.bf16.mxu0 0
        %2163 = vmatpush1.bf16.msra.mxu0 %v2089
        %2164 = vmatprep.subr.bf16.mxu0 0
        %2165 = vmatpush1.bf16.msra.mxu0 %v2090
        %2166 = vmatprep.subr.bf16.mxu0 0
        %2167 = vmatpush1.bf16.msra.mxu0 %v2091
        %2168 = vmatprep.subr.bf16.mxu0 0
        %2169 = vmatpush1.bf16.msra.mxu0 %v2092
        %2170 = vmatprep.subr.bf16.mxu0 0
        %2171 = vmatpush1.bf16.msra.mxu0 %v2093
        %2172 = vmatprep.subr.bf16.mxu0 0
        %2173 = vmatpush1.bf16.msra.mxu0 %v2094
        %2174 = vmatprep.subr.bf16.mxu0 0
        %2175 = vmatpush1.bf16.msra.mxu0 %v2095
        %2176 = vmatprep.mubr.bf16.mxu0 %v1878
        %2177 = vmatmul.mubr.bf16.gmra.mrb[0].mxu0 %v1877
        %v2178 = vpop.f32.mrb[0].mxu0
        %v2179 = vadd.f32 %v1950, %v2178
        %v2180 = vpop.f32.mrb[0].mxu0
        %v2181 = vpop.f32.mrb[0].mxu0
        %v2182 = vpop.f32.mrb[0].mxu0
        %2183 = vdwg.mxu0
        %2184 = vmatprep.subr.bf16.mxu0 0
        %2185 = vmatpush1.bf16.msra.mxu0 %v2096
        %2186 = vmatprep.subr.bf16.mxu0 0
        %2187 = vmatpush1.bf16.msra.mxu0 %v2097
        %2188 = vmatprep.subr.bf16.mxu0 0
        %2189 = vmatpush1.bf16.msra.mxu0 %v2098
        %2190 = vmatprep.subr.bf16.mxu0 0
        %2191 = vmatpush1.bf16.msra.mxu0 %v2099
        %2192 = vmatprep.subr.bf16.mxu0 0
        %2193 = vmatpush1.bf16.msra.mxu0 %v2100
        %2194 = vmatprep.subr.bf16.mxu0 0
        %2195 = vmatpush1.bf16.msra.mxu0 %v2101
        %2196 = vmatprep.subr.bf16.mxu0 0
        %2197 = vmatpush1.bf16.msra.mxu0 %v2102
        %2198 = vmatprep.subr.bf16.mxu0 0
        %2199 = vmatpush1.bf16.msra.mxu0 %v2103
        %2200 = vmatprep.subr.bf16.mxu0 0
        %2201 = vmatpush1.bf16.msra.mxu0 %v2104
        %2202 = vmatprep.subr.bf16.mxu0 0
        %2203 = vmatpush1.bf16.msra.mxu0 %v2105
        %2204 = vmatprep.subr.bf16.mxu0 0
        %2205 = vmatpush1.bf16.msra.mxu0 %v2106
        %2206 = vmatprep.subr.bf16.mxu0 0
        %2207 = vmatpush1.bf16.msra.mxu0 %v2107
        %2208 = vmatprep.subr.bf16.mxu0 0
        %2209 = vmatpush1.bf16.msra.mxu0 %v2108
        %2210 = vmatprep.subr.bf16.mxu0 0
        %2211 = vmatpush1.bf16.msra.mxu0 %v2109
        %2212 = vmatprep.subr.bf16.mxu0 0
        %2213 = vmatpush1.bf16.msra.mxu0 %v2110
        %2214 = vmatprep.subr.bf16.mxu0 0
        %2215 = vmatpush1.bf16.msra.mxu0 %v2111
        %2216 = vmatprep.mubr.bf16.mxu0 %v1880
        %2217 = vmatmul.mubr.bf16.gmra.mrb[0].mxu0 %v1879
        %v2218 = vpop.f32.mrb[0].mxu0
        %v2219 = vadd.f32 %v2179, %v2218
        %v2220 = vpop.f32.mrb[0].mxu0
        %v2221 = vpop.f32.mrb[0].mxu0
        %v2222 = vpop.f32.mrb[0].mxu0
        %2223 = vdwg.mxu0
        %v2224 = vadd.f32 %v1540, %v2219
        %2225 = vst [vmem:[%s538] sm:$0xff] %v2224
        %s2226 = sand.u32 %s319, 1
        %s2227 = scalar_lea.sflag [#allocation4], %s2226
        %s2228 = sand.u32 %s319, 1
        %s2229 = smul.addr %s2228, 8
        %s2230 = scalar_lea.vmem [#allocation14], %s2229
        // Predicated region
        $region101: #{tpu_custom_call.1} parent=71 // pred_check
          %p2231 = pneg %p329
        $region102: #{tpu_custom_call.1} parent=71 // pred_check_branch
          %2233 = sbr.rel (%p2231) target = $region104
        $region103: #{tpu_custom_call.1} parent=71 // pred_region
          %s2235 = ssub.s32 128, 128
          %2236 = vsyncadd %s2227, %s2235
          %s2237 = smul.addr %s33, 128
          %s2238 = scalar_lea.hbm %s13, %s2237
          %s2240 = sshll.u32 %s2230, 4
          %s2241 = int_to_ptr.vmem [resolvable:$true] %s2240
          %2243 = dma.vmem_to_hbm [thread:$0]  %s2241, 128, %s2238, %s2227
        $region104: #{tpu_custom_call.1} parent=71 // pred_fallthru
          _
      $region72: #{tpu_custom_call.1} parent=5 // pred_fallthru
        _
      %p2244 = scmp.le.s32.totalorder 2, %s28
      // Predicated region
      $region105: #{tpu_custom_call.1} parent=5 // pred_check
        %p2245 = pneg %p2244
      $region106: #{tpu_custom_call.1} parent=5 // pred_check_branch
        %2247 = sbr.rel (%p2245) target = $region108
      $region107: #{tpu_custom_call.1} parent=5 // pred_region
        %s2248 = ssub.s32 %s28, 2
        // Predicated region
        $region109: #{tpu_custom_call.1} parent=107 // pred_check
          %p2249 = pneg %p335
        $region110: #{tpu_custom_call.1} parent=107 // pred_check_branch
          %2251 = sbr.rel (%p2249) target = $region112
        $region111: #{tpu_custom_call.1} parent=107 // pred_region
          %s2252 = sand.u32 %s320, 1
          %s2253 = scalar_lea.sflag [#allocation4], %s2252
          %s2254 = sand.u32 %s320, 1
          %s2255 = smul.addr %s2254, 8
          %s2256 = scalar_lea.vmem [#allocation14], %s2255
          %2257 = dma.done %s2253, 128
        $region112: #{tpu_custom_call.1} parent=107 // pred_fallthru
          _
      $region108: #{tpu_custom_call.1} parent=5 // pred_fallthru
        _
    $region6: #{tpu_custom_call.1} parent=1 // loop_footer
      %s32 = sadd.s32 1, %s28
    $region7: #{tpu_custom_call.1} parent=1 // loop_footer_branch
      %27 = sbr.rel target = $region3
    $region8: #{tpu_custom_call.1} parent=1 // loop_exit
      _
    %2258 = vsyncpa [#allocation3], 1
    %s2259 = scalar_lea.sflag [#allocation3], 1
    %2260 = vsyncpa %s2259, 1
    %2261 = vsyncpa [#allocation6], 1
    %2262 = vsyncpa [#allocation9], 1
    %2263 = vsyncpa [#allocation12], 1
    %2264 = vsyncpa [#allocation4], 1
    %s2265 = scalar_lea.sflag [#allocation4], 1
    %2266 = vsyncpa %s2265, 1

</llo_original>
